<compile_context>
chip_gen: v7x
topology: tpu7x:2x2x1
jax: 0.10.0
libtpu: 0.0.40
codegen_flags: <defaults>
</compile_context>

<pallas_src>
import functools

import jax
import jax.numpy as jnp
from jax.experimental import pallas as pl
from jax.experimental.pallas import tpu as pltpu

EPS = 1e-5
F_IN, HIDDEN, F_OUT = 74, 250, 1
H_PAD, O_PAD = 256, 128
NUM_LINEAR = 11
N_HIDDEN_STACK = 9  # linears 1..9 of the hidden stack, all (250, 250)
# activation after each of the 10 hidden linears (final linear has none)
ACTS = ["tanh", "tanh", "relu", "tanh", "tanh", "relu", "tanh", "tanh", "relu", "tanh"]


def _cdiv(a, b):
    return -(-a // b)


def _round_up(n, m):
    return _cdiv(n, m) * m


def _use_bf16_activations():
    """bf16 tanh/relu only where the VPU/EUP support bf16 (v6e/v7x); f32 otherwise."""
    try:
        kind = jax.devices()[0].device_kind.lower()
    except Exception:
        return True
    return not any(tag in kind for tag in ("v2", "v3", "v4", "v5"))


def mlp_kernel(x_ref, w0_ref, wh_ref, wo_ref, bh_ref, bo_ref, out_ref, *, bf16_acts):
    """One batch tile through the whole (BN-folded) MLP.

    MXU operands are bf16, accumulation is f32 (preferred_element_type). The
    bias-add is always f32; the activation runs in bf16 on v6e/v7x (feeding the
    next matmul directly) and in f32 on v5e.
    """

    def activate(acc_f32, bias_f32, act):
        h = acc_f32 + bias_f32  # f32 bias add, broadcast (1, H_PAD)
        if bf16_acts:
            h = h.astype(jnp.bfloat16)
            return jnp.tanh(h) if act == "tanh" else jnp.maximum(h, 0.0)
        h = jnp.tanh(h) if act == "tanh" else jnp.maximum(h, 0.0)
        return h.astype(jnp.bfloat16)  # cast once for the next MXU op

    # Layer 0: (folded BatchNorm +) Linear(74, 250) + Tanh
    acc = jnp.dot(x_ref[...].astype(jnp.bfloat16), w0_ref[...],
                  preferred_element_type=jnp.float32)
    h = activate(acc, bh_ref[0], ACTS[0])

    # Layers 1..9: Linear(250, 250) + {Tanh, ReLU}
    for i in range(1, 1 + N_HIDDEN_STACK):
        acc = jnp.dot(h, wh_ref[i - 1], preferred_element_type=jnp.float32)
        h = activate(acc, bh_ref[i], ACTS[i])

    # Output layer: Linear(250, 1)
    # TODO(synk): Dropout(p=0.3) and training-mode (batch-statistics) BatchNorm
    # are not implemented; this kernel is inference/eval-mode only.
    out_ref[...] = jnp.dot(h, wo_ref[...],
                           preferred_element_type=jnp.float32) + bo_ref[...]


def init_params(key):
    """Deterministic synthetic parameters matching torch.nn defaults (shape-wise)."""
    dims_in = [F_IN] + [HIDDEN] * 10
    dims_out = [HIDDEN] * 10 + [F_OUT]
    ws, bs = [], []
    for din, dout in zip(dims_in, dims_out):
        key, kw, kb = jax.random.split(key, 3)
        bound = 1.0 / jnp.sqrt(jnp.float32(din))
        ws.append(jax.random.uniform(kw, (din, dout), jnp.float32, -bound, bound))
        bs.append(jax.random.uniform(kb, (dout,), jnp.float32, -bound, bound))
    key, kg, kbt, km, kv = jax.random.split(key, 5)
    gamma = 1.0 + 0.1 * jax.random.normal(kg, (F_IN,), jnp.float32)
    beta = 0.1 * jax.random.normal(kbt, (F_IN,), jnp.float32)
    mean = 0.1 * jax.random.normal(km, (F_IN,), jnp.float32)
    var = 1.0 + 0.1 * jax.random.uniform(kv, (F_IN,), jnp.float32)
    return ws, bs, (gamma, beta, mean, var)


def pack_params(ws, bs, bn):
    """Fold eval-mode BatchNorm into the first Linear, pad (250->256, 1->128) and pack.

    Returns (w0, wh_stack, wo, bh_stack, bo): weights bf16, biases f32.
    The 74-row input dimension of w0 is NOT padded (Mosaic pads K internally).
    """
    gamma, beta, mean, var = bn
    scale = gamma * jax.lax.rsqrt(var + EPS)          # (74,)
    shift = beta - mean * scale                       # (74,)
    w0 = ws[0] * scale[:, None]                       # (74, 250) row-scaled
    b0 = bs[0] + shift @ ws[0]                        # (250,)

    w0_p = jnp.zeros((F_IN, H_PAD), jnp.float32).at[:, :HIDDEN].set(w0)
    wh_p = jnp.zeros((N_HIDDEN_STACK, H_PAD, H_PAD), jnp.float32)
    for i in range(N_HIDDEN_STACK):
        wh_p = wh_p.at[i, :HIDDEN, :HIDDEN].set(ws[1 + i])
    wo_p = jnp.zeros((H_PAD, O_PAD), jnp.float32).at[:HIDDEN, :F_OUT].set(ws[10])

    bh_p = jnp.zeros((1 + N_HIDDEN_STACK, 1, H_PAD), jnp.float32)
    bh_p = bh_p.at[0, 0, :HIDDEN].set(b0)
    for i in range(N_HIDDEN_STACK):
        bh_p = bh_p.at[1 + i, 0, :HIDDEN].set(bs[1 + i])
    bo_p = jnp.zeros((1, O_PAD), jnp.float32).at[0, :F_OUT].set(bs[10])

    return (w0_p.astype(jnp.bfloat16), wh_p.astype(jnp.bfloat16),
            wo_p.astype(jnp.bfloat16), bh_p, bo_p)


def neural_network_forward(x, ws, bs, bn, *, max_tile=1024):
    """x: (B, 74) (or (B, ...) flattened to 74) float32 -> logits (B, 1) float32."""
    x = x.reshape(x.shape[0], -1).astype(jnp.float32)   # Flatten
    B = x.shape[0]

    # Adaptive batch tiling: bound padding waste to <8 rows per tile, and use
    # >= 2 grid steps once the batch is non-trivial so the "parallel" axis can
    # shard across both TensorCores on v7x (a single extra step is negligible
    # on single-TC v5e/v6e).
    ntiles = max(2, _cdiv(B, max_tile)) if B >= 16 else 1
    TB = _round_up(_cdiv(B, ntiles), 8)
    B_pad = ntiles * TB

    x_p = x if B_pad == B else jnp.pad(x, ((0, B_pad - B), (0, 0)))
    w0, wh, wo, bh, bo = pack_params(ws, bs, bn)

    kernel = functools.partial(mlp_kernel, bf16_acts=_use_bf16_activations())

    out_p = pl.pallas_call(
        kernel,
        out_shape=jax.ShapeDtypeStruct((B_pad, O_PAD), jnp.float32),
        grid_spec=pltpu.PrefetchScalarGridSpec(
            num_scalar_prefetch=0,
            grid=(ntiles,),
            in_specs=[
                pl.BlockSpec((TB, F_IN), lambda i: (i, 0)),                        # x tile (74 lanes)
                pl.BlockSpec((F_IN, H_PAD), lambda i: (0, 0)),                     # w0 (BN folded)
                pl.BlockSpec((N_HIDDEN_STACK, H_PAD, H_PAD), lambda i: (0, 0, 0)), # hidden W stack
                pl.BlockSpec((H_PAD, O_PAD), lambda i: (0, 0)),                    # w_out
                pl.BlockSpec((1 + N_HIDDEN_STACK, 1, H_PAD), lambda i: (0, 0, 0)), # bias stack
                pl.BlockSpec((1, O_PAD), lambda i: (0, 0)),                        # b_out
            ],
            out_specs=pl.BlockSpec((TB, O_PAD), lambda i: (i, 0)),
        ),
        compiler_params=pltpu.CompilerParams(
            dimension_semantics=("parallel",)),
    )(x_p, w0, wh, wo, bh, bo)

    return out_p[:B, :F_OUT]


def reference_forward(x, ws, bs, bn):
    """Pure-JAX f32 reference mirroring the PyTorch eval-mode forward."""
    gamma, beta, mean, var = bn
    h = (x - mean) / jnp.sqrt(var + EPS) * gamma + beta
    for i in range(NUM_LINEAR):
        h = h @ ws[i] + bs[i]
        if i < NUM_LINEAR - 1:
            h = jnp.tanh(h) if ACTS[i] == "tanh" else jnp.maximum(h, 0.0)
    return h


if __name__ == "__main__":
    key = jax.random.PRNGKey(0)
    key, kx = jax.random.split(key)
    B = 8
    x = jax.random.normal(kx, (B, F_IN), jnp.float32)

    ws, bs, bn = init_params(key)

    out = neural_network_forward(x, ws, bs, bn)
    out = jax.block_until_ready(out)

    ref = reference_forward(x, ws, bs, bn)
    assert out.shape == (B, 1), out.shape
    # bf16 matmul operands / bf16 activations (f32 accumulate) vs f32 reference
    assert jnp.allclose(out, ref, atol=5e-2, rtol=5e-2), (out, ref)

    print("KERNEL_OK")
</pallas_src>

<mosaic_0001>
module attributes {stable_mosaic.version = 11 : i64} {
  func.func @mlp_kernel(%arg0: i32, %arg1: memref<8x74xf32, #tpu.memory_space<vmem>>, %arg2: memref<74x256xbf16, #tpu.memory_space<vmem>>, %arg3: memref<9x256x256xbf16, #tpu.memory_space<vmem>>, %arg4: memref<256x128xbf16, #tpu.memory_space<vmem>>, %arg5: memref<10x1x256xf32, #tpu.memory_space<vmem>>, %arg6: memref<1x128xf32, #tpu.memory_space<vmem>>, %arg7: memref<8x128xf32, #tpu.memory_space<vmem>>) attributes {dimension_semantics = [#tpu.dimension_semantics<parallel>], iteration_bounds = array<i64: 1>, scalar_prefetch = 0 : i64, scratch_operands = 0 : i64, tpu.core_type = #tpu.core_type<tc>, window_params = [{transform_indices = @transform_0, window_bounds = array<i64: 8, 74>}, {pipeline_mode = #tpu.pipeline_mode<synchronous>, transform_indices = @transform_1, window_bounds = array<i64: 74, 256>}, {pipeline_mode = #tpu.pipeline_mode<synchronous>, transform_indices = @transform_2, window_bounds = array<i64: 9, 256, 256>}, {pipeline_mode = #tpu.pipeline_mode<synchronous>, transform_indices = @transform_3, window_bounds = array<i64: 256, 128>}, {pipeline_mode = #tpu.pipeline_mode<synchronous>, transform_indices = @transform_4, window_bounds = array<i64: 10, 1, 256>}, {pipeline_mode = #tpu.pipeline_mode<synchronous>, transform_indices = @transform_5, window_bounds = array<i64: 1, 128>}, {transform_indices = @transform_6, window_bounds = array<i64: 8, 128>}]} {
    %c0 = arith.constant 0 : index
    %c0_0 = arith.constant 0 : index
    %0 = vector.load %arg1[%c0, %c0_0] : memref<8x74xf32, #tpu.memory_space<vmem>>, vector<8x74xf32>
    %1 = arith.truncf %0 : vector<8x74xf32> to vector<8x74xbf16>
    %c0_1 = arith.constant 0 : index
    %c0_2 = arith.constant 0 : index
    %2 = vector.load %arg2[%c0_1, %c0_2] : memref<74x256xbf16, #tpu.memory_space<vmem>>, vector<74x256xbf16>
    %cst = arith.constant dense<0.000000e+00> : vector<8x256xf32>
    %3 = tpu.matmul %1, %2, %cst {dimension_numbers = #tpu.dot_dimension_numbers<[1], [0], [0], [1], [0, 0, 1, 1], [], []>} : vector<8x74xbf16>, vector<74x256xbf16>, vector<8x256xf32> -> vector<8x256xf32>
    %c0_3 = arith.constant 0 : index
    %c0_4 = arith.constant 0 : index
    %c0_5 = arith.constant 0 : index
    %4 = vector.load %arg5[%c0_3, %c0_4, %c0_5] : memref<10x1x256xf32, #tpu.memory_space<vmem>>, vector<1x1x256xf32>
    %5 = vector.shape_cast %4 : vector<1x1x256xf32> to vector<1x256xf32>
    %6 = vector.broadcast %5 : vector<1x256xf32> to vector<8x256xf32>
    %7 = arith.addf %3, %6 : vector<8x256xf32>
    %8 = arith.truncf %7 : vector<8x256xf32> to vector<8x256xbf16>
    %9 = math.tanh %8 : vector<8x256xbf16>
    %c0_6 = arith.constant 0 : index
    %c0_7 = arith.constant 0 : index
    %c0_8 = arith.constant 0 : index
    %10 = vector.load %arg3[%c0_6, %c0_7, %c0_8] : memref<9x256x256xbf16, #tpu.memory_space<vmem>>, vector<1x256x256xbf16>
    %11 = vector.shape_cast %10 : vector<1x256x256xbf16> to vector<256x256xbf16>
    %cst_9 = arith.constant dense<0.000000e+00> : vector<8x256xf32>
    %12 = tpu.matmul %9, %11, %cst_9 {dimension_numbers = #tpu.dot_dimension_numbers<[1], [0], [0], [1], [0, 0, 1, 1], [], []>} : vector<8x256xbf16>, vector<256x256xbf16>, vector<8x256xf32> -> vector<8x256xf32>
    %c1 = arith.constant 1 : index
    %c0_10 = arith.constant 0 : index
    %c0_11 = arith.constant 0 : index
    %13 = vector.load %arg5[%c1, %c0_10, %c0_11] : memref<10x1x256xf32, #tpu.memory_space<vmem>>, vector<1x1x256xf32>
    %14 = vector.shape_cast %13 : vector<1x1x256xf32> to vector<1x256xf32>
    %15 = vector.broadcast %14 : vector<1x256xf32> to vector<8x256xf32>
    %16 = arith.addf %12, %15 : vector<8x256xf32>
    %17 = arith.truncf %16 : vector<8x256xf32> to vector<8x256xbf16>
    %18 = math.tanh %17 : vector<8x256xbf16>
    %c1_12 = arith.constant 1 : index
    %c0_13 = arith.constant 0 : index
    %c0_14 = arith.constant 0 : index
    %19 = vector.load %arg3[%c1_12, %c0_13, %c0_14] : memref<9x256x256xbf16, #tpu.memory_space<vmem>>, vector<1x256x256xbf16>
    %20 = vector.shape_cast %19 : vector<1x256x256xbf16> to vector<256x256xbf16>
    %cst_15 = arith.constant dense<0.000000e+00> : vector<8x256xf32>
    %21 = tpu.matmul %18, %20, %cst_15 {dimension_numbers = #tpu.dot_dimension_numbers<[1], [0], [0], [1], [0, 0, 1, 1], [], []>} : vector<8x256xbf16>, vector<256x256xbf16>, vector<8x256xf32> -> vector<8x256xf32>
    %c2 = arith.constant 2 : index
    %c0_16 = arith.constant 0 : index
    %c0_17 = arith.constant 0 : index
    %22 = vector.load %arg5[%c2, %c0_16, %c0_17] : memref<10x1x256xf32, #tpu.memory_space<vmem>>, vector<1x1x256xf32>
    %23 = vector.shape_cast %22 : vector<1x1x256xf32> to vector<1x256xf32>
    %24 = vector.broadcast %23 : vector<1x256xf32> to vector<8x256xf32>
    %25 = arith.addf %21, %24 : vector<8x256xf32>
    %26 = arith.truncf %25 : vector<8x256xf32> to vector<8x256xbf16>
    %cst_18 = arith.constant 0.000000e+00 : bf16
    %27 = vector.broadcast %cst_18 : bf16 to vector<8x256xbf16>
    %28 = arith.maximumf %26, %27 : vector<8x256xbf16>
    %c2_19 = arith.constant 2 : index
    %c0_20 = arith.constant 0 : index
    %c0_21 = arith.constant 0 : index
    %29 = vector.load %arg3[%c2_19, %c0_20, %c0_21] : memref<9x256x256xbf16, #tpu.memory_space<vmem>>, vector<1x256x256xbf16>
    %30 = vector.shape_cast %29 : vector<1x256x256xbf16> to vector<256x256xbf16>
    %cst_22 = arith.constant dense<0.000000e+00> : vector<8x256xf32>
    %31 = tpu.matmul %28, %30, %cst_22 {dimension_numbers = #tpu.dot_dimension_numbers<[1], [0], [0], [1], [0, 0, 1, 1], [], []>} : vector<8x256xbf16>, vector<256x256xbf16>, vector<8x256xf32> -> vector<8x256xf32>
    %c3 = arith.constant 3 : index
    %c0_23 = arith.constant 0 : index
    %c0_24 = arith.constant 0 : index
    %32 = vector.load %arg5[%c3, %c0_23, %c0_24] : memref<10x1x256xf32, #tpu.memory_space<vmem>>, vector<1x1x256xf32>
    %33 = vector.shape_cast %32 : vector<1x1x256xf32> to vector<1x256xf32>
    %34 = vector.broadcast %33 : vector<1x256xf32> to vector<8x256xf32>
    %35 = arith.addf %31, %34 : vector<8x256xf32>
    %36 = arith.truncf %35 : vector<8x256xf32> to vector<8x256xbf16>
    %37 = math.tanh %36 : vector<8x256xbf16>
    %c3_25 = arith.constant 3 : index
    %c0_26 = arith.constant 0 : index
    %c0_27 = arith.constant 0 : index
    %38 = vector.load %arg3[%c3_25, %c0_26, %c0_27] : memref<9x256x256xbf16, #tpu.memory_space<vmem>>, vector<1x256x256xbf16>
    %39 = vector.shape_cast %38 : vector<1x256x256xbf16> to vector<256x256xbf16>
    %cst_28 = arith.constant dense<0.000000e+00> : vector<8x256xf32>
    %40 = tpu.matmul %37, %39, %cst_28 {dimension_numbers = #tpu.dot_dimension_numbers<[1], [0], [0], [1], [0, 0, 1, 1], [], []>} : vector<8x256xbf16>, vector<256x256xbf16>, vector<8x256xf32> -> vector<8x256xf32>
    %c4 = arith.constant 4 : index
    %c0_29 = arith.constant 0 : index
    %c0_30 = arith.constant 0 : index
    %41 = vector.load %arg5[%c4, %c0_29, %c0_30] : memref<10x1x256xf32, #tpu.memory_space<vmem>>, vector<1x1x256xf32>
    %42 = vector.shape_cast %41 : vector<1x1x256xf32> to vector<1x256xf32>
    %43 = vector.broadcast %42 : vector<1x256xf32> to vector<8x256xf32>
    %44 = arith.addf %40, %43 : vector<8x256xf32>
    %45 = arith.truncf %44 : vector<8x256xf32> to vector<8x256xbf16>
    %46 = math.tanh %45 : vector<8x256xbf16>
    %c4_31 = arith.constant 4 : index
    %c0_32 = arith.constant 0 : index
    %c0_33 = arith.constant 0 : index
    %47 = vector.load %arg3[%c4_31, %c0_32, %c0_33] : memref<9x256x256xbf16, #tpu.memory_space<vmem>>, vector<1x256x256xbf16>
    %48 = vector.shape_cast %47 : vector<1x256x256xbf16> to vector<256x256xbf16>
    %cst_34 = arith.constant dense<0.000000e+00> : vector<8x256xf32>
    %49 = tpu.matmul %46, %48, %cst_34 {dimension_numbers = #tpu.dot_dimension_numbers<[1], [0], [0], [1], [0, 0, 1, 1], [], []>} : vector<8x256xbf16>, vector<256x256xbf16>, vector<8x256xf32> -> vector<8x256xf32>
    %c5 = arith.constant 5 : index
    %c0_35 = arith.constant 0 : index
    %c0_36 = arith.constant 0 : index
    %50 = vector.load %arg5[%c5, %c0_35, %c0_36] : memref<10x1x256xf32, #tpu.memory_space<vmem>>, vector<1x1x256xf32>
    %51 = vector.shape_cast %50 : vector<1x1x256xf32> to vector<1x256xf32>
    %52 = vector.broadcast %51 : vector<1x256xf32> to vector<8x256xf32>
    %53 = arith.addf %49, %52 : vector<8x256xf32>
    %54 = arith.truncf %53 : vector<8x256xf32> to vector<8x256xbf16>
    %cst_37 = arith.constant 0.000000e+00 : bf16
    %55 = vector.broadcast %cst_37 : bf16 to vector<8x256xbf16>
    %56 = arith.maximumf %54, %55 : vector<8x256xbf16>
    %c5_38 = arith.constant 5 : index
    %c0_39 = arith.constant 0 : index
    %c0_40 = arith.constant 0 : index
    %57 = vector.load %arg3[%c5_38, %c0_39, %c0_40] : memref<9x256x256xbf16, #tpu.memory_space<vmem>>, vector<1x256x256xbf16>
    %58 = vector.shape_cast %57 : vector<1x256x256xbf16> to vector<256x256xbf16>
    %cst_41 = arith.constant dense<0.000000e+00> : vector<8x256xf32>
    %59 = tpu.matmul %56, %58, %cst_41 {dimension_numbers = #tpu.dot_dimension_numbers<[1], [0], [0], [1], [0, 0, 1, 1], [], []>} : vector<8x256xbf16>, vector<256x256xbf16>, vector<8x256xf32> -> vector<8x256xf32>
    %c6 = arith.constant 6 : index
    %c0_42 = arith.constant 0 : index
    %c0_43 = arith.constant 0 : index
    %60 = vector.load %arg5[%c6, %c0_42, %c0_43] : memref<10x1x256xf32, #tpu.memory_space<vmem>>, vector<1x1x256xf32>
    %61 = vector.shape_cast %60 : vector<1x1x256xf32> to vector<1x256xf32>
    %62 = vector.broadcast %61 : vector<1x256xf32> to vector<8x256xf32>
    %63 = arith.addf %59, %62 : vector<8x256xf32>
    %64 = arith.truncf %63 : vector<8x256xf32> to vector<8x256xbf16>
    %65 = math.tanh %64 : vector<8x256xbf16>
    %c6_44 = arith.constant 6 : index
    %c0_45 = arith.constant 0 : index
    %c0_46 = arith.constant 0 : index
    %66 = vector.load %arg3[%c6_44, %c0_45, %c0_46] : memref<9x256x256xbf16, #tpu.memory_space<vmem>>, vector<1x256x256xbf16>
    %67 = vector.shape_cast %66 : vector<1x256x256xbf16> to vector<256x256xbf16>
    %cst_47 = arith.constant dense<0.000000e+00> : vector<8x256xf32>
    %68 = tpu.matmul %65, %67, %cst_47 {dimension_numbers = #tpu.dot_dimension_numbers<[1], [0], [0], [1], [0, 0, 1, 1], [], []>} : vector<8x256xbf16>, vector<256x256xbf16>, vector<8x256xf32> -> vector<8x256xf32>
    %c7 = arith.constant 7 : index
    %c0_48 = arith.constant 0 : index
    %c0_49 = arith.constant 0 : index
    %69 = vector.load %arg5[%c7, %c0_48, %c0_49] : memref<10x1x256xf32, #tpu.memory_space<vmem>>, vector<1x1x256xf32>
    %70 = vector.shape_cast %69 : vector<1x1x256xf32> to vector<1x256xf32>
    %71 = vector.broadcast %70 : vector<1x256xf32> to vector<8x256xf32>
    %72 = arith.addf %68, %71 : vector<8x256xf32>
    %73 = arith.truncf %72 : vector<8x256xf32> to vector<8x256xbf16>
    %74 = math.tanh %73 : vector<8x256xbf16>
    %c7_50 = arith.constant 7 : index
    %c0_51 = arith.constant 0 : index
    %c0_52 = arith.constant 0 : index
    %75 = vector.load %arg3[%c7_50, %c0_51, %c0_52] : memref<9x256x256xbf16, #tpu.memory_space<vmem>>, vector<1x256x256xbf16>
    %76 = vector.shape_cast %75 : vector<1x256x256xbf16> to vector<256x256xbf16>
    %cst_53 = arith.constant dense<0.000000e+00> : vector<8x256xf32>
    %77 = tpu.matmul %74, %76, %cst_53 {dimension_numbers = #tpu.dot_dimension_numbers<[1], [0], [0], [1], [0, 0, 1, 1], [], []>} : vector<8x256xbf16>, vector<256x256xbf16>, vector<8x256xf32> -> vector<8x256xf32>
    %c8 = arith.constant 8 : index
    %c0_54 = arith.constant 0 : index
    %c0_55 = arith.constant 0 : index
    %78 = vector.load %arg5[%c8, %c0_54, %c0_55] : memref<10x1x256xf32, #tpu.memory_space<vmem>>, vector<1x1x256xf32>
    %79 = vector.shape_cast %78 : vector<1x1x256xf32> to vector<1x256xf32>
    %80 = vector.broadcast %79 : vector<1x256xf32> to vector<8x256xf32>
    %81 = arith.addf %77, %80 : vector<8x256xf32>
    %82 = arith.truncf %81 : vector<8x256xf32> to vector<8x256xbf16>
    %cst_56 = arith.constant 0.000000e+00 : bf16
    %83 = vector.broadcast %cst_56 : bf16 to vector<8x256xbf16>
    %84 = arith.maximumf %82, %83 : vector<8x256xbf16>
    %c8_57 = arith.constant 8 : index
    %c0_58 = arith.constant 0 : index
    %c0_59 = arith.constant 0 : index
    %85 = vector.load %arg3[%c8_57, %c0_58, %c0_59] : memref<9x256x256xbf16, #tpu.memory_space<vmem>>, vector<1x256x256xbf16>
    %86 = vector.shape_cast %85 : vector<1x256x256xbf16> to vector<256x256xbf16>
    %cst_60 = arith.constant dense<0.000000e+00> : vector<8x256xf32>
    %87 = tpu.matmul %84, %86, %cst_60 {dimension_numbers = #tpu.dot_dimension_numbers<[1], [0], [0], [1], [0, 0, 1, 1], [], []>} : vector<8x256xbf16>, vector<256x256xbf16>, vector<8x256xf32> -> vector<8x256xf32>
    %c9 = arith.constant 9 : index
    %c0_61 = arith.constant 0 : index
    %c0_62 = arith.constant 0 : index
    %88 = vector.load %arg5[%c9, %c0_61, %c0_62] : memref<10x1x256xf32, #tpu.memory_space<vmem>>, vector<1x1x256xf32>
    %89 = vector.shape_cast %88 : vector<1x1x256xf32> to vector<1x256xf32>
    %90 = vector.broadcast %89 : vector<1x256xf32> to vector<8x256xf32>
    %91 = arith.addf %87, %90 : vector<8x256xf32>
    %92 = arith.truncf %91 : vector<8x256xf32> to vector<8x256xbf16>
    %93 = math.tanh %92 : vector<8x256xbf16>
    %c0_63 = arith.constant 0 : index
    %c0_64 = arith.constant 0 : index
    %94 = vector.load %arg4[%c0_63, %c0_64] : memref<256x128xbf16, #tpu.memory_space<vmem>>, vector<256x128xbf16>
    %cst_65 = arith.constant dense<0.000000e+00> : vector<8x128xf32>
    %95 = tpu.matmul %93, %94, %cst_65 {dimension_numbers = #tpu.dot_dimension_numbers<[1], [0], [0], [1], [0, 0, 1, 1], [], []>} : vector<8x256xbf16>, vector<256x128xbf16>, vector<8x128xf32> -> vector<8x128xf32>
    %c0_66 = arith.constant 0 : index
    %c0_67 = arith.constant 0 : index
    %96 = vector.load %arg6[%c0_66, %c0_67] : memref<1x128xf32, #tpu.memory_space<vmem>>, vector<1x128xf32>
    %97 = vector.broadcast %96 : vector<1x128xf32> to vector<8x128xf32>
    %98 = arith.addf %95, %97 : vector<8x128xf32>
    %c0_68 = arith.constant 0 : index
    %c0_69 = arith.constant 0 : index
    %99 = vector.load %arg7[%c0_68, %c0_69] : memref<8x128xf32, #tpu.memory_space<vmem>>, vector<8x128xf32>
    tpu.vector_store %arg7[%c0_68, %c0_69], %98 {strides = array<i32>} : memref<8x128xf32, #tpu.memory_space<vmem>>, vector<8x128xf32>,
    return
  }
  func.func @transform_0(%arg0: i32) -> (i32, i32) {
    %c0_i32 = arith.constant 0 : i32
    %c0_i32_0 = arith.constant 0 : i32
    return %arg0, %c0_i32 : i32, i32
  }
  func.func @transform_1(%arg0: i32) -> (i32, i32) {
    %c0_i32 = arith.constant 0 : i32
    %c0_i32_0 = arith.constant 0 : i32
    %c0_i32_1 = arith.constant 0 : i32
    return %c0_i32, %c0_i32_0 : i32, i32
  }
  func.func @transform_2(%arg0: i32) -> (i32, i32, i32) {
    %c0_i32 = arith.constant 0 : i32
    %c0_i32_0 = arith.constant 0 : i32
    %c0_i32_1 = arith.constant 0 : i32
    %c0_i32_2 = arith.constant 0 : i32
    return %c0_i32, %c0_i32_0, %c0_i32_1 : i32, i32, i32
  }
  func.func @transform_3(%arg0: i32) -> (i32, i32) {
    %c0_i32 = arith.constant 0 : i32
    %c0_i32_0 = arith.constant 0 : i32
    %c0_i32_1 = arith.constant 0 : i32
    return %c0_i32, %c0_i32_0 : i32, i32
  }
  func.func @transform_4(%arg0: i32) -> (i32, i32, i32) {
    %c0_i32 = arith.constant 0 : i32
    %c0_i32_0 = arith.constant 0 : i32
    %c0_i32_1 = arith.constant 0 : i32
    %c0_i32_2 = arith.constant 0 : i32
    return %c0_i32, %c0_i32_0, %c0_i32_1 : i32, i32, i32
  }
  func.func @transform_5(%arg0: i32) -> (i32, i32) {
    %c0_i32 = arith.constant 0 : i32
    %c0_i32_0 = arith.constant 0 : i32
    %c0_i32_1 = arith.constant 0 : i32
    return %c0_i32, %c0_i32_0 : i32, i32
  }
  func.func @transform_6(%arg0: i32) -> (i32, i32) {
    %c0_i32 = arith.constant 0 : i32
    %c0_i32_0 = arith.constant 0 : i32
    return %arg0, %c0_i32 : i32, i32
  }
}

</mosaic_0001>

<llo_original>
// kernel: tpu_custom_call.1
$region0: #{tpu_custom_call.1}
  #allocation0 [shape = 'u32[]', space=smem, size = 0x4, offset = 0x4, fixed_abs, tag = 'smem constant byte address 0x4 - core index']
  #allocation1 [shape = 'u32[144,128]{1,0:T(1,128)}', space=vmem, size = 0x12000, scoped, tag = 'internal scratch']
  %s0 = inlined_call_operand.hbm [shape: f32[8,74], index: 0, kind: input, shape index: {}]
  %s1 = inlined_call_operand.hbm [shape: bf16[74,256], index: 1, kind: input, shape index: {}]
  %s2 = inlined_call_operand.hbm [shape: bf16[9,256,256], index: 2, kind: input, shape index: {}]
  %s3 = inlined_call_operand.hbm [shape: bf16[256,128], index: 3, kind: input, shape index: {}]
  %s4 = inlined_call_operand.hbm [shape: f32[10,1,256], index: 4, kind: input, shape index: {}]
  %s5 = inlined_call_operand.hbm [shape: f32[1,128], index: 5, kind: input, shape index: {}]
  %s6 = inlined_call_operand.hbm [shape: f32[8,128], index: 6, kind: output, shape index: {}]
  %s7 = sld [smem:[#allocation0]]
  $region58: #{tpu_custom_call.1} parent=0
    _
  %s9 = ssub.s32 1, %s7
  %s10 = scalar_select 0, %s9, %s7
  $region1: #{tpu_custom_call.1} parent=0
    #allocation2 [shape = 'u8[4096]{0}', space=vmem, size = 0x1000, scoped, tag = 'input window, operand 0, single buffered']
    #allocation3 [shape = 's32[1]{0}', space=sflag, size = 0x4, scoped, tag = 'scoped memory for tpu_custom_call.1']
    #allocation4 [shape = 's32[1]{0}', space=sflag, size = 0x4, scoped, tag = 'scoped memory for tpu_custom_call.1']
    #allocation5 [shape = 'u8[40960]{0}', space=vmem, size = 0xa000, scoped, tag = 'input window, operand 1, single buffered']
    #allocation6 [shape = 's32[1]{0}', space=sflag, size = 0x4, scoped, tag = 'scoped memory for tpu_custom_call.1']
    #allocation7 [shape = 'u8[1179648]{0}', space=vmem, size = 0x120000, scoped, tag = 'input window, operand 2, single buffered']
    #allocation8 [shape = 'u8[65536]{0}', space=vmem, size = 0x10000, scoped, tag = 'input window, operand 3, single buffered']
    #allocation9 [shape = 's32[1]{0}', space=sflag, size = 0x4, scoped, tag = 'scoped memory for tpu_custom_call.1']
    #allocation10 [shape = 'u8[10240]{0}', space=vmem, size = 0x2800, scoped, tag = 'input window, operand 4, single buffered']
    #allocation11 [shape = 'u8[512]{0}', space=vmem, size = 0x400, scoped, tag = 'input window, operand 5, single buffered']
    #allocation12 [shape = 's32[1]{0}', space=sflag, size = 0x4, scoped, tag = 'scoped memory for tpu_custom_call.1']
    #allocation13 [shape = 'u8[4096]{0}', space=vmem, size = 0x1000, scoped, tag = 'output window, operand 0, single buffered']
    %11 = vsyncpa [#allocation3], 0
    %12 = vsyncpa [#allocation6], 0
    %13 = vsyncpa [#allocation9], 0
    %14 = vsyncpa [#allocation12], 0
    %15 = vsyncpa [#allocation4], 0
    // Predicated region
    $region2: #{tpu_custom_call.1} parent=1 // pred_check
      _
    $region3: #{tpu_custom_call.1} parent=1 // pred_check_branch
      %17 = sbr.rel (0) target = $region5
    $region4: #{tpu_custom_call.1} parent=1 // pred_region
      %s19 = ssub.s32 128, 128
      %20 = vsyncadd [#allocation3], %s19
      %s22 = sshll.u32 [#allocation2], 4
      %s23 = int_to_ptr.vmem [resolvable:$true] %s22
      %25 = dma.hbm_to_vmem [thread:$0]  %s0, 128, %s23, [#allocation3]
    $region5: #{tpu_custom_call.1} parent=1 // pred_fallthru
      _
    // Predicated region
    $region6: #{tpu_custom_call.1} parent=1 // pred_check
      _
    $region7: #{tpu_custom_call.1} parent=1 // pred_check_branch
      %27 = sbr.rel (0) target = $region9
    $region8: #{tpu_custom_call.1} parent=1 // pred_region
      %s29 = ssub.s32 1280, 1280
      %30 = vsyncadd [#allocation6], %s29
      %s31 = sshll.u32 [#allocation5], 4
      %s32 = int_to_ptr.vmem [resolvable:$true] %s31
      %37 = dma.hbm_to_vmem [thread:$0]  %s1, 1280, %s32, [#allocation6], 128, 128, 8
    $region9: #{tpu_custom_call.1} parent=1 // pred_fallthru
      _
    // Predicated region
    $region10: #{tpu_custom_call.1} parent=1 // pred_check
      _
    $region11: #{tpu_custom_call.1} parent=1 // pred_check_branch
      %39 = sbr.rel (0) target = $region13
    $region12: #{tpu_custom_call.1} parent=1 // pred_region
      %s41 = ssub.s32 36864, 36864
      %42 = vsyncadd [#allocation6], %s41
      %s43 = sshll.u32 [#allocation7], 4
      %s44 = int_to_ptr.vmem [resolvable:$true] %s43
      %49 = dma.hbm_to_vmem [thread:$0]  %s2, 36864, %s44, [#allocation6], 128, 128, 8
    $region13: #{tpu_custom_call.1} parent=1 // pred_fallthru
      _
    // Predicated region
    $region14: #{tpu_custom_call.1} parent=1 // pred_check
      _
    $region15: #{tpu_custom_call.1} parent=1 // pred_check_branch
      %51 = sbr.rel (0) target = $region17
    $region16: #{tpu_custom_call.1} parent=1 // pred_region
      %s53 = ssub.s32 2048, 2048
      %54 = vsyncadd [#allocation9], %s53
      %s55 = sshll.u32 [#allocation8], 4
      %s56 = int_to_ptr.vmem [resolvable:$true] %s55
      %61 = dma.hbm_to_vmem [thread:$0]  %s3, 2048, %s56, [#allocation9], 64, 64, 4
    $region17: #{tpu_custom_call.1} parent=1 // pred_fallthru
      _
    // Predicated region
    $region18: #{tpu_custom_call.1} parent=1 // pred_check
      _
    $region19: #{tpu_custom_call.1} parent=1 // pred_check_branch
      %63 = sbr.rel (0) target = $region21
    $region20: #{tpu_custom_call.1} parent=1 // pred_region
      %s65 = ssub.s32 320, 320
      %66 = vsyncadd [#allocation9], %s65
      %s67 = sshll.u32 [#allocation10], 4
      %s68 = int_to_ptr.vmem [resolvable:$true] %s67
      %73 = dma.hbm_to_vmem [thread:$0]  %s4, 320, %s68, [#allocation9], 32, 32, 2
    $region21: #{tpu_custom_call.1} parent=1 // pred_fallthru
      _
    // Predicated region
    $region22: #{tpu_custom_call.1} parent=1 // pred_check
      _
    $region23: #{tpu_custom_call.1} parent=1 // pred_check_branch
      %75 = sbr.rel (0) target = $region25
    $region24: #{tpu_custom_call.1} parent=1 // pred_region
      %s77 = ssub.s32 16, 16
      %78 = vsyncadd [#allocation12], %s77
      %s80 = sshll.u32 [#allocation11], 4
      %s81 = int_to_ptr.vmem [resolvable:$true] %s80
      %83 = dma.hbm_to_vmem [thread:$0]  %s5, 16, %s81, [#allocation12]
    $region25: #{tpu_custom_call.1} parent=1 // pred_fallthru
      _
    // Predicated region
    $region26: #{tpu_custom_call.1} parent=1 // pred_check
      _
    $region27: #{tpu_custom_call.1} parent=1 // pred_check_branch
      %85 = sbr.rel (0) target = $region29
    $region28: #{tpu_custom_call.1} parent=1 // pred_region
      %86 = dma.done [#allocation3], 128
    $region29: #{tpu_custom_call.1} parent=1 // pred_fallthru
      _
    // Predicated region
    $region30: #{tpu_custom_call.1} parent=1 // pred_check
      _
    $region31: #{tpu_custom_call.1} parent=1 // pred_check_branch
      %88 = sbr.rel (0) target = $region33
    $region32: #{tpu_custom_call.1} parent=1 // pred_region
      %89 = dma.done [#allocation6], 1280
    $region33: #{tpu_custom_call.1} parent=1 // pred_fallthru
      _
    // Predicated region
    $region34: #{tpu_custom_call.1} parent=1 // pred_check
      _
    $region35: #{tpu_custom_call.1} parent=1 // pred_check_branch
      %91 = sbr.rel (0) target = $region37
    $region36: #{tpu_custom_call.1} parent=1 // pred_region
      %92 = dma.done [#allocation6], 36864
    $region37: #{tpu_custom_call.1} parent=1 // pred_fallthru
      _
    // Predicated region
    $region38: #{tpu_custom_call.1} parent=1 // pred_check
      _
    $region39: #{tpu_custom_call.1} parent=1 // pred_check_branch
      %94 = sbr.rel (0) target = $region41
    $region40: #{tpu_custom_call.1} parent=1 // pred_region
      %95 = dma.done [#allocation9], 2048
    $region41: #{tpu_custom_call.1} parent=1 // pred_fallthru
      _
    // Predicated region
    $region42: #{tpu_custom_call.1} parent=1 // pred_check
      _
    $region43: #{tpu_custom_call.1} parent=1 // pred_check_branch
      %97 = sbr.rel (0) target = $region45
    $region44: #{tpu_custom_call.1} parent=1 // pred_region
      %98 = dma.done [#allocation9], 320
    $region45: #{tpu_custom_call.1} parent=1 // pred_fallthru
      _
    // Predicated region
    $region46: #{tpu_custom_call.1} parent=1 // pred_check
      _
    $region47: #{tpu_custom_call.1} parent=1 // pred_check_branch
      %100 = sbr.rel (0) target = $region49
    $region48: #{tpu_custom_call.1} parent=1 // pred_region
      %101 = dma.done [#allocation12], 16
    $region49: #{tpu_custom_call.1} parent=1 // pred_fallthru
      _
    %v103 = vld [vmem:[#allocation2] sm:$0xff]
    %v104 = vpack.c.bf16 %v103, %v103
    %v105 = vld [vmem:[#allocation5] sm:$0xff]
    %v106 = vld [vmem:[#allocation5 + $0x8] sm:$0xff]
    %v107 = vld [vmem:[#allocation5 + $0x10] sm:$0xff]
    %v108 = vld [vmem:[#allocation5 + $0x18] sm:$0xff]
    %v109 = vld [vmem:[#allocation5 + $0x20] sm:$0xff]
    %v110 = vld [vmem:[#allocation5 + $0x28] sm:$0xff]
    %v111 = vld [vmem:[#allocation5 + $0x30] sm:$0xff]
    %v112 = vld [vmem:[#allocation5 + $0x38] sm:$0xff]
    %v113 = vld [vmem:[#allocation5 + $0x40] sm:$0xff]
    %v114 = vld [vmem:[#allocation5 + $0x48] sm:$0x11]
    %v115 = vld [vmem:[#allocation10] sm:$0x3]
    %v117 = vlaneseq
    %v118 = vshrl.u32 %v117, 7
    %v119 = vsub.s32 0, %v118
    %v120 = vrot.slane %v115, %v119
    %v121 = vlaneseq
    %v122 = vshrl.u32 %v121, 7
    %v123 = vsub.s32 1, %v122
    %v124 = vrot.slane %v115, %v123
    %v137 = vunpack.c.l.b16 %v105
    %v138 = vunpack.c.h.b16 %v105
    %v139 = vunpack.c.l.b16 %v106
    %v140 = vunpack.c.h.b16 %v106
    %v141 = vunpack.c.l.b16 %v107
    %v142 = vunpack.c.h.b16 %v107
    %v143 = vunpack.c.l.b16 %v108
    %v144 = vunpack.c.h.b16 %v108
    %v145 = vunpack.c.l.b16 %v109
    %v146 = vunpack.c.h.b16 %v109
    %v147 = vunpack.c.l.b16 %v110
    %v148 = vunpack.c.h.b16 %v110
    %v149 = vunpack.c.l.b16 %v111
    %v150 = vunpack.c.h.b16 %v111
    %v151 = vunpack.c.l.b16 %v112
    %v152 = vunpack.c.h.b16 %v112
    %v153 = vunpack.c.l.b16 %v113
    %v154 = vunpack.c.h.b16 %v113
    %v155 = vunpack.c.l.b16 %v114
    %v156 = vunpack.c.h.b16 %v114
    %v157 = vpack.c.b16 %v139, %v137
    %v158 = vpack.c.b16 %v140, %v138
    %v159 = vpack.c.b16 %v143, %v141
    %v160 = vpack.c.b16 %v144, %v142
    %v161 = vpack.c.b16 %v147, %v145
    %v162 = vpack.c.b16 %v148, %v146
    %v163 = vpack.c.b16 %v151, %v149
    %v164 = vpack.c.b16 %v152, %v150
    %v165 = vpack.c.b16 %v155, %v153
    %v166 = vpack.c.b16 %v156, %v154
    %vm175 = vcmask 605184
    %v177 = vsel %vm175, %v104, 0
    %vm179 = vcmask 1044480
    %v181 = vsel %vm179, %v165, 0
    %v184 = vsel %vm179, %v166, 0
    %186 = vmatprep.subr.bf16.mxu0 %v158
    %187 = vmatpush1.bf16.msra.mxu0 %v157
    %188 = vmatprep.subr.bf16.mxu0 %v160
    %189 = vmatpush1.bf16.msra.mxu0 %v159
    %190 = vmatprep.subr.bf16.mxu0 %v162
    %191 = vmatpush1.bf16.msra.mxu0 %v161
    %192 = vmatprep.subr.bf16.mxu0 %v164
    %193 = vmatpush1.bf16.msra.mxu0 %v163
    %194 = vmatprep.subr.bf16.mxu0 %v184
    %195 = vmatpush1.bf16.msra.mxu0 %v181
    %196 = vmatprep.subr.bf16.mxu0 0
    %197 = vmatpush1.bf16.msra.mxu0 0
    %198 = vmatprep.subr.bf16.mxu0 0
    %199 = vmatpush1.bf16.msra.mxu0 0
    %200 = vmatprep.subr.bf16.mxu0 0
    %201 = vmatpush1.bf16.msra.mxu0 0
    %202 = vmatprep.subr.bf16.mxu0 0
    %203 = vmatpush1.bf16.msra.mxu0 0
    %204 = vmatprep.subr.bf16.mxu0 0
    %205 = vmatpush1.bf16.msra.mxu0 0
    %206 = vmatprep.subr.bf16.mxu0 0
    %207 = vmatpush1.bf16.msra.mxu0 0
    %208 = vmatprep.subr.bf16.mxu0 0
    %209 = vmatpush1.bf16.msra.mxu0 0
    %210 = vmatprep.subr.bf16.mxu0 0
    %211 = vmatpush1.bf16.msra.mxu0 0
    %212 = vmatprep.subr.bf16.mxu0 0
    %213 = vmatpush1.bf16.msra.mxu0 0
    %214 = vmatprep.subr.bf16.mxu0 0
    %215 = vmatpush1.bf16.msra.mxu0 0
    %216 = vmatprep.subr.bf16.mxu0 0
    %217 = vmatpush1.bf16.msra.mxu0 0
    %218 = vmatprep.mubr.bf16.mxu0 0
    %219 = vmatmul.mubr.bf16.gmra.mrb[0].mxu0 %v177
    %v220 = vpop.f32.mrb[0].mxu0
    %v221 = vadd.f32 %v120, %v220
    %v222 = vpop.f32.mrb[0].mxu0
    %v223 = vadd.f32 %v124, %v222
    %v224 = vpop.f32.mrb[0].mxu0
    %v225 = vpop.f32.mrb[0].mxu0
    %226 = vdwg.mxu0
    %v227 = vpack.c.bf16 %v221, %v221
    %v228 = vpack.c.bf16 %v223, %v223
    %v229 = vtanh.bf16.pop %v227
    %v230 = vtanh.bf16.pop %v228
    %v231 = vld [vmem:[#allocation7] sm:$0xff]
    %v232 = vld [vmem:[#allocation7 + $0x8] sm:$0xff]
    %v233 = vld [vmem:[#allocation7 + $0x10] sm:$0xff]
    %v234 = vld [vmem:[#allocation7 + $0x18] sm:$0xff]
    %v235 = vld [vmem:[#allocation7 + $0x20] sm:$0xff]
    %v236 = vld [vmem:[#allocation7 + $0x28] sm:$0xff]
    %v237 = vld [vmem:[#allocation7 + $0x30] sm:$0xff]
    %v238 = vld [vmem:[#allocation7 + $0x38] sm:$0xff]
    %v239 = vld [vmem:[#allocation7 + $0x40] sm:$0xff]
    %v240 = vld [vmem:[#allocation7 + $0x48] sm:$0xff]
    %v241 = vld [vmem:[#allocation7 + $0x50] sm:$0xff]
    %v242 = vld [vmem:[#allocation7 + $0x58] sm:$0xff]
    %v243 = vld [vmem:[#allocation7 + $0x60] sm:$0xff]
    %v244 = vld [vmem:[#allocation7 + $0x68] sm:$0xff]
    %v245 = vld [vmem:[#allocation7 + $0x70] sm:$0xff]
    %v246 = vld [vmem:[#allocation7 + $0x78] sm:$0xff]
    %v247 = vld [vmem:[#allocation7 + $0x80] sm:$0xff]
    %v248 = vld [vmem:[#allocation7 + $0x88] sm:$0xff]
    %v249 = vld [vmem:[#allocation7 + $0x90] sm:$0xff]
    %v250 = vld [vmem:[#allocation7 + $0x98] sm:$0xff]
    %v251 = vld [vmem:[#allocation7 + $0xa0] sm:$0xff]
    %v252 = vld [vmem:[#allocation7 + $0xa8] sm:$0xff]
    %v253 = vld [vmem:[#allocation7 + $0xb0] sm:$0xff]
    %v254 = vld [vmem:[#allocation7 + $0xb8] sm:$0xff]
    %v255 = vld [vmem:[#allocation7 + $0xc0] sm:$0xff]
    %v256 = vld [vmem:[#allocation7 + $0xc8] sm:$0xff]
    %v257 = vld [vmem:[#allocation7 + $0xd0] sm:$0xff]
    %v258 = vld [vmem:[#allocation7 + $0xd8] sm:$0xff]
    %v259 = vld [vmem:[#allocation7 + $0xe0] sm:$0xff]
    %v260 = vld [vmem:[#allocation7 + $0xe8] sm:$0xff]
    %v261 = vld [vmem:[#allocation7 + $0xf0] sm:$0xff]
    %v262 = vld [vmem:[#allocation7 + $0xf8] sm:$0xff]
    %s263 = scalar_lea.vmem [#allocation10], 2
    %v264 = vld [vmem:[%s263] sm:$0x3]
    %v266 = vlaneseq
    %v267 = vshrl.u32 %v266, 7
    %v268 = vsub.s32 0, %v267
    %v269 = vrot.slane %v264, %v268
    %v270 = vlaneseq
    %v271 = vshrl.u32 %v270, 7
    %v272 = vsub.s32 1, %v271
    %v273 = vrot.slane %v264, %v272
    %v308 = vunpack.c.l.b16 %v231
    %v309 = vunpack.c.h.b16 %v231
    %v310 = vunpack.c.l.b16 %v232
    %v311 = vunpack.c.h.b16 %v232
    %v312 = vunpack.c.l.b16 %v233
    %v313 = vunpack.c.h.b16 %v233
    %v314 = vunpack.c.l.b16 %v234
    %v315 = vunpack.c.h.b16 %v234
    %v316 = vunpack.c.l.b16 %v235
    %v317 = vunpack.c.h.b16 %v235
    %v318 = vunpack.c.l.b16 %v236
    %v319 = vunpack.c.h.b16 %v236
    %v320 = vunpack.c.l.b16 %v237
    %v321 = vunpack.c.h.b16 %v237
    %v322 = vunpack.c.l.b16 %v238
    %v323 = vunpack.c.h.b16 %v238
    %v324 = vunpack.c.l.b16 %v239
    %v325 = vunpack.c.h.b16 %v239
    %v326 = vunpack.c.l.b16 %v240
    %v327 = vunpack.c.h.b16 %v240
    %v328 = vunpack.c.l.b16 %v241
    %v329 = vunpack.c.h.b16 %v241
    %v330 = vunpack.c.l.b16 %v242
    %v331 = vunpack.c.h.b16 %v242
    %v332 = vunpack.c.l.b16 %v243
    %v333 = vunpack.c.h.b16 %v243
    %v334 = vunpack.c.l.b16 %v244
    %v335 = vunpack.c.h.b16 %v244
    %v336 = vunpack.c.l.b16 %v245
    %v337 = vunpack.c.h.b16 %v245
    %v338 = vunpack.c.l.b16 %v246
    %v339 = vunpack.c.h.b16 %v246
    %v340 = vunpack.c.l.b16 %v247
    %v341 = vunpack.c.h.b16 %v247
    %v342 = vunpack.c.l.b16 %v248
    %v343 = vunpack.c.h.b16 %v248
    %v344 = vunpack.c.l.b16 %v249
    %v345 = vunpack.c.h.b16 %v249
    %v346 = vunpack.c.l.b16 %v250
    %v347 = vunpack.c.h.b16 %v250
    %v348 = vunpack.c.l.b16 %v251
    %v349 = vunpack.c.h.b16 %v251
    %v350 = vunpack.c.l.b16 %v252
    %v351 = vunpack.c.h.b16 %v252
    %v352 = vunpack.c.l.b16 %v253
    %v353 = vunpack.c.h.b16 %v253
    %v354 = vunpack.c.l.b16 %v254
    %v355 = vunpack.c.h.b16 %v254
    %v356 = vunpack.c.l.b16 %v255
    %v357 = vunpack.c.h.b16 %v255
    %v358 = vunpack.c.l.b16 %v256
    %v359 = vunpack.c.h.b16 %v256
    %v360 = vunpack.c.l.b16 %v257
    %v361 = vunpack.c.h.b16 %v257
    %v362 = vunpack.c.l.b16 %v258
    %v363 = vunpack.c.h.b16 %v258
    %v364 = vunpack.c.l.b16 %v259
    %v365 = vunpack.c.h.b16 %v259
    %v366 = vunpack.c.l.b16 %v260
    %v367 = vunpack.c.h.b16 %v260
    %v368 = vunpack.c.l.b16 %v261
    %v369 = vunpack.c.h.b16 %v261
    %v370 = vunpack.c.l.b16 %v262
    %v371 = vunpack.c.h.b16 %v262
    %v372 = vpack.c.b16 %v310, %v308
    %v373 = vpack.c.b16 %v311, %v309
    %v374 = vpack.c.b16 %v314, %v312
    %v375 = vpack.c.b16 %v315, %v313
    %v376 = vpack.c.b16 %v318, %v316
    %v377 = vpack.c.b16 %v319, %v317
    %v378 = vpack.c.b16 %v322, %v320
    %v379 = vpack.c.b16 %v323, %v321
    %v380 = vpack.c.b16 %v326, %v324
    %v381 = vpack.c.b16 %v327, %v325
    %v382 = vpack.c.b16 %v330, %v328
    %v383 = vpack.c.b16 %v331, %v329
    %v384 = vpack.c.b16 %v334, %v332
    %v385 = vpack.c.b16 %v335, %v333
    %v386 = vpack.c.b16 %v338, %v336
    %v387 = vpack.c.b16 %v339, %v337
    %v388 = vpack.c.b16 %v342, %v340
    %v389 = vpack.c.b16 %v343, %v341
    %v390 = vpack.c.b16 %v346, %v344
    %v391 = vpack.c.b16 %v347, %v345
    %v392 = vpack.c.b16 %v350, %v348
    %v393 = vpack.c.b16 %v351, %v349
    %v394 = vpack.c.b16 %v354, %v352
    %v395 = vpack.c.b16 %v355, %v353
    %v396 = vpack.c.b16 %v358, %v356
    %v397 = vpack.c.b16 %v359, %v357
    %v398 = vpack.c.b16 %v362, %v360
    %v399 = vpack.c.b16 %v363, %v361
    %v400 = vpack.c.b16 %v366, %v364
    %v401 = vpack.c.b16 %v367, %v365
    %v402 = vpack.c.b16 %v370, %v368
    %v403 = vpack.c.b16 %v371, %v369
    %436 = vmatprep.subr.bf16.mxu0 %v373
    %437 = vmatpush1.bf16.msra.mxu0 %v372
    %438 = vmatprep.subr.bf16.mxu0 %v375
    %439 = vmatpush1.bf16.msra.mxu0 %v374
    %440 = vmatprep.subr.bf16.mxu0 %v377
    %441 = vmatpush1.bf16.msra.mxu0 %v376
    %442 = vmatprep.subr.bf16.mxu0 %v379
    %443 = vmatpush1.bf16.msra.mxu0 %v378
    %444 = vmatprep.subr.bf16.mxu0 %v381
    %445 = vmatpush1.bf16.msra.mxu0 %v380
    %446 = vmatprep.subr.bf16.mxu0 %v383
    %447 = vmatpush1.bf16.msra.mxu0 %v382
    %448 = vmatprep.subr.bf16.mxu0 %v385
    %449 = vmatpush1.bf16.msra.mxu0 %v384
    %450 = vmatprep.subr.bf16.mxu0 %v387
    %451 = vmatpush1.bf16.msra.mxu0 %v386
    %452 = vmatprep.subr.bf16.mxu0 %v389
    %453 = vmatpush1.bf16.msra.mxu0 %v388
    %454 = vmatprep.subr.bf16.mxu0 %v391
    %455 = vmatpush1.bf16.msra.mxu0 %v390
    %456 = vmatprep.subr.bf16.mxu0 %v393
    %457 = vmatpush1.bf16.msra.mxu0 %v392
    %458 = vmatprep.subr.bf16.mxu0 %v395
    %459 = vmatpush1.bf16.msra.mxu0 %v394
    %460 = vmatprep.subr.bf16.mxu0 %v397
    %461 = vmatpush1.bf16.msra.mxu0 %v396
    %462 = vmatprep.subr.bf16.mxu0 %v399
    %463 = vmatpush1.bf16.msra.mxu0 %v398
    %464 = vmatprep.subr.bf16.mxu0 %v401
    %465 = vmatpush1.bf16.msra.mxu0 %v400
    %466 = vmatprep.subr.bf16.mxu0 %v403
    %467 = vmatpush1.bf16.msra.mxu0 %v402
    %468 = vmatprep.mubr.bf16.mxu0 %v230
    %469 = vmatmul.mubr.bf16.gmra.mrb[0].mxu0 %v229
    %v470 = vpop.f32.mrb[0].mxu0
    %v471 = vadd.f32 %v269, %v470
    %v472 = vpop.f32.mrb[0].mxu0
    %v473 = vadd.f32 %v273, %v472
    %v474 = vpop.f32.mrb[0].mxu0
    %v475 = vpop.f32.mrb[0].mxu0
    %476 = vdwg.mxu0
    %v477 = vpack.c.bf16 %v471, %v471
    %v478 = vpack.c.bf16 %v473, %v473
    %v479 = vtanh.bf16.pop %v477
    %v480 = vtanh.bf16.pop %v478
    %s481 = scalar_lea.vmem [#allocation7], 256
    %v482 = vld [vmem:[%s481] sm:$0xff]
    %v483 = vld [vmem:[%s481 + $0x8] sm:$0xff]
    %v484 = vld [vmem:[%s481 + $0x10] sm:$0xff]
    %v485 = vld [vmem:[%s481 + $0x18] sm:$0xff]
    %v486 = vld [vmem:[%s481 + $0x20] sm:$0xff]
    %v487 = vld [vmem:[%s481 + $0x28] sm:$0xff]
    %v488 = vld [vmem:[%s481 + $0x30] sm:$0xff]
    %v489 = vld [vmem:[%s481 + $0x38] sm:$0xff]
    %v490 = vld [vmem:[%s481 + $0x40] sm:$0xff]
    %v491 = vld [vmem:[%s481 + $0x48] sm:$0xff]
    %v492 = vld [vmem:[%s481 + $0x50] sm:$0xff]
    %v493 = vld [vmem:[%s481 + $0x58] sm:$0xff]
    %v494 = vld [vmem:[%s481 + $0x60] sm:$0xff]
    %v495 = vld [vmem:[%s481 + $0x68] sm:$0xff]
    %v496 = vld [vmem:[%s481 + $0x70] sm:$0xff]
    %v497 = vld [vmem:[%s481 + $0x78] sm:$0xff]
    %v498 = vld [vmem:[%s481 + $0x80] sm:$0xff]
    %v499 = vld [vmem:[%s481 + $0x88] sm:$0xff]
    %v500 = vld [vmem:[%s481 + $0x90] sm:$0xff]
    %v501 = vld [vmem:[%s481 + $0x98] sm:$0xff]
    %v502 = vld [vmem:[%s481 + $0xa0] sm:$0xff]
    %v503 = vld [vmem:[%s481 + $0xa8] sm:$0xff]
    %v504 = vld [vmem:[%s481 + $0xb0] sm:$0xff]
    %v505 = vld [vmem:[%s481 + $0xb8] sm:$0xff]
    %v506 = vld [vmem:[%s481 + $0xc0] sm:$0xff]
    %v507 = vld [vmem:[%s481 + $0xc8] sm:$0xff]
    %v508 = vld [vmem:[%s481 + $0xd0] sm:$0xff]
    %v509 = vld [vmem:[%s481 + $0xd8] sm:$0xff]
    %v510 = vld [vmem:[%s481 + $0xe0] sm:$0xff]
    %v511 = vld [vmem:[%s481 + $0xe8] sm:$0xff]
    %v512 = vld [vmem:[%s481 + $0xf0] sm:$0xff]
    %v513 = vld [vmem:[%s481 + $0xf8] sm:$0xff]
    %s514 = scalar_lea.vmem [#allocation10], 4
    %v515 = vld [vmem:[%s514] sm:$0x3]
    %v517 = vlaneseq
    %v518 = vshrl.u32 %v517, 7
    %v519 = vsub.s32 0, %v518
    %v520 = vrot.slane %v515, %v519
    %v521 = vlaneseq
    %v522 = vshrl.u32 %v521, 7
    %v523 = vsub.s32 1, %v522
    %v524 = vrot.slane %v515, %v523
    %v559 = vunpack.c.l.b16 %v482
    %v560 = vunpack.c.h.b16 %v482
    %v561 = vunpack.c.l.b16 %v483
    %v562 = vunpack.c.h.b16 %v483
    %v563 = vunpack.c.l.b16 %v484
    %v564 = vunpack.c.h.b16 %v484
    %v565 = vunpack.c.l.b16 %v485
    %v566 = vunpack.c.h.b16 %v485
    %v567 = vunpack.c.l.b16 %v486
    %v568 = vunpack.c.h.b16 %v486
    %v569 = vunpack.c.l.b16 %v487
    %v570 = vunpack.c.h.b16 %v487
    %v571 = vunpack.c.l.b16 %v488
    %v572 = vunpack.c.h.b16 %v488
    %v573 = vunpack.c.l.b16 %v489
    %v574 = vunpack.c.h.b16 %v489
    %v575 = vunpack.c.l.b16 %v490
    %v576 = vunpack.c.h.b16 %v490
    %v577 = vunpack.c.l.b16 %v491
    %v578 = vunpack.c.h.b16 %v491
    %v579 = vunpack.c.l.b16 %v492
    %v580 = vunpack.c.h.b16 %v492
    %v581 = vunpack.c.l.b16 %v493
    %v582 = vunpack.c.h.b16 %v493
    %v583 = vunpack.c.l.b16 %v494
    %v584 = vunpack.c.h.b16 %v494
    %v585 = vunpack.c.l.b16 %v495
    %v586 = vunpack.c.h.b16 %v495
    %v587 = vunpack.c.l.b16 %v496
    %v588 = vunpack.c.h.b16 %v496
    %v589 = vunpack.c.l.b16 %v497
    %v590 = vunpack.c.h.b16 %v497
    %v591 = vunpack.c.l.b16 %v498
    %v592 = vunpack.c.h.b16 %v498
    %v593 = vunpack.c.l.b16 %v499
    %v594 = vunpack.c.h.b16 %v499
    %v595 = vunpack.c.l.b16 %v500
    %v596 = vunpack.c.h.b16 %v500
    %v597 = vunpack.c.l.b16 %v501
    %v598 = vunpack.c.h.b16 %v501
    %v599 = vunpack.c.l.b16 %v502
    %v600 = vunpack.c.h.b16 %v502
    %v601 = vunpack.c.l.b16 %v503
    %v602 = vunpack.c.h.b16 %v503
    %v603 = vunpack.c.l.b16 %v504
    %v604 = vunpack.c.h.b16 %v504
    %v605 = vunpack.c.l.b16 %v505
    %v606 = vunpack.c.h.b16 %v505
    %v607 = vunpack.c.l.b16 %v506
    %v608 = vunpack.c.h.b16 %v506
    %v609 = vunpack.c.l.b16 %v507
    %v610 = vunpack.c.h.b16 %v507
    %v611 = vunpack.c.l.b16 %v508
    %v612 = vunpack.c.h.b16 %v508
    %v613 = vunpack.c.l.b16 %v509
    %v614 = vunpack.c.h.b16 %v509
    %v615 = vunpack.c.l.b16 %v510
    %v616 = vunpack.c.h.b16 %v510
    %v617 = vunpack.c.l.b16 %v511
    %v618 = vunpack.c.h.b16 %v511
    %v619 = vunpack.c.l.b16 %v512
    %v620 = vunpack.c.h.b16 %v512
    %v621 = vunpack.c.l.b16 %v513
    %v622 = vunpack.c.h.b16 %v513
    %v623 = vpack.c.b16 %v561, %v559
    %v624 = vpack.c.b16 %v562, %v560
    %v625 = vpack.c.b16 %v565, %v563
    %v626 = vpack.c.b16 %v566, %v564
    %v627 = vpack.c.b16 %v569, %v567
    %v628 = vpack.c.b16 %v570, %v568
    %v629 = vpack.c.b16 %v573, %v571
    %v630 = vpack.c.b16 %v574, %v572
    %v631 = vpack.c.b16 %v577, %v575
    %v632 = vpack.c.b16 %v578, %v576
    %v633 = vpack.c.b16 %v581, %v579
    %v634 = vpack.c.b16 %v582, %v580
    %v635 = vpack.c.b16 %v585, %v583
    %v636 = vpack.c.b16 %v586, %v584
    %v637 = vpack.c.b16 %v589, %v587
    %v638 = vpack.c.b16 %v590, %v588
    %v639 = vpack.c.b16 %v593, %v591
    %v640 = vpack.c.b16 %v594, %v592
    %v641 = vpack.c.b16 %v597, %v595
    %v642 = vpack.c.b16 %v598, %v596
    %v643 = vpack.c.b16 %v601, %v599
    %v644 = vpack.c.b16 %v602, %v600
    %v645 = vpack.c.b16 %v605, %v603
    %v646 = vpack.c.b16 %v606, %v604
    %v647 = vpack.c.b16 %v609, %v607
    %v648 = vpack.c.b16 %v610, %v608
    %v649 = vpack.c.b16 %v613, %v611
    %v650 = vpack.c.b16 %v614, %v612
    %v651 = vpack.c.b16 %v617, %v615
    %v652 = vpack.c.b16 %v618, %v616
    %v653 = vpack.c.b16 %v621, %v619
    %v654 = vpack.c.b16 %v622, %v620
    %687 = vmatprep.subr.bf16.mxu0 %v624
    %688 = vmatpush1.bf16.msra.mxu0 %v623
    %689 = vmatprep.subr.bf16.mxu0 %v626
    %690 = vmatpush1.bf16.msra.mxu0 %v625
    %691 = vmatprep.subr.bf16.mxu0 %v628
    %692 = vmatpush1.bf16.msra.mxu0 %v627
    %693 = vmatprep.subr.bf16.mxu0 %v630
    %694 = vmatpush1.bf16.msra.mxu0 %v629
    %695 = vmatprep.subr.bf16.mxu0 %v632
    %696 = vmatpush1.bf16.msra.mxu0 %v631
    %697 = vmatprep.subr.bf16.mxu0 %v634
    %698 = vmatpush1.bf16.msra.mxu0 %v633
    %699 = vmatprep.subr.bf16.mxu0 %v636
    %700 = vmatpush1.bf16.msra.mxu0 %v635
    %701 = vmatprep.subr.bf16.mxu0 %v638
    %702 = vmatpush1.bf16.msra.mxu0 %v637
    %703 = vmatprep.subr.bf16.mxu0 %v640
    %704 = vmatpush1.bf16.msra.mxu0 %v639
    %705 = vmatprep.subr.bf16.mxu0 %v642
    %706 = vmatpush1.bf16.msra.mxu0 %v641
    %707 = vmatprep.subr.bf16.mxu0 %v644
    %708 = vmatpush1.bf16.msra.mxu0 %v643
    %709 = vmatprep.subr.bf16.mxu0 %v646
    %710 = vmatpush1.bf16.msra.mxu0 %v645
    %711 = vmatprep.subr.bf16.mxu0 %v648
    %712 = vmatpush1.bf16.msra.mxu0 %v647
    %713 = vmatprep.subr.bf16.mxu0 %v650
    %714 = vmatpush1.bf16.msra.mxu0 %v649
    %715 = vmatprep.subr.bf16.mxu0 %v652
    %716 = vmatpush1.bf16.msra.mxu0 %v651
    %717 = vmatprep.subr.bf16.mxu0 %v654
    %718 = vmatpush1.bf16.msra.mxu0 %v653
    %719 = vmatprep.mubr.bf16.mxu0 %v480
    %720 = vmatmul.mubr.bf16.gmra.mrb[0].mxu0 %v479
    %v721 = vpop.f32.mrb[0].mxu0
    %v722 = vadd.f32 %v520, %v721
    %v723 = vpop.f32.mrb[0].mxu0
    %v724 = vadd.f32 %v524, %v723
    %v725 = vpop.f32.mrb[0].mxu0
    %v726 = vpop.f32.mrb[0].mxu0
    %727 = vdwg.mxu0
    %v728 = vpack.c.bf16 %v722, %v722
    %v729 = vpack.c.bf16 %v724, %v724
    %v730 = vmax.bf16 %v728, 0
    %v731 = vmax.bf16 %v729, 0
    %s732 = scalar_lea.vmem [#allocation7], 512
    %v733 = vld [vmem:[%s732] sm:$0xff]
    %v734 = vld [vmem:[%s732 + $0x8] sm:$0xff]
    %v735 = vld [vmem:[%s732 + $0x10] sm:$0xff]
    %v736 = vld [vmem:[%s732 + $0x18] sm:$0xff]
    %v737 = vld [vmem:[%s732 + $0x20] sm:$0xff]
    %v738 = vld [vmem:[%s732 + $0x28] sm:$0xff]
    %v739 = vld [vmem:[%s732 + $0x30] sm:$0xff]
    %v740 = vld [vmem:[%s732 + $0x38] sm:$0xff]
    %v741 = vld [vmem:[%s732 + $0x40] sm:$0xff]
    %v742 = vld [vmem:[%s732 + $0x48] sm:$0xff]
    %v743 = vld [vmem:[%s732 + $0x50] sm:$0xff]
    %v744 = vld [vmem:[%s732 + $0x58] sm:$0xff]
    %v745 = vld [vmem:[%s732 + $0x60] sm:$0xff]
    %v746 = vld [vmem:[%s732 + $0x68] sm:$0xff]
    %v747 = vld [vmem:[%s732 + $0x70] sm:$0xff]
    %v748 = vld [vmem:[%s732 + $0x78] sm:$0xff]
    %v749 = vld [vmem:[%s732 + $0x80] sm:$0xff]
    %v750 = vld [vmem:[%s732 + $0x88] sm:$0xff]
    %v751 = vld [vmem:[%s732 + $0x90] sm:$0xff]
    %v752 = vld [vmem:[%s732 + $0x98] sm:$0xff]
    %v753 = vld [vmem:[%s732 + $0xa0] sm:$0xff]
    %v754 = vld [vmem:[%s732 + $0xa8] sm:$0xff]
    %v755 = vld [vmem:[%s732 + $0xb0] sm:$0xff]
    %v756 = vld [vmem:[%s732 + $0xb8] sm:$0xff]
    %v757 = vld [vmem:[%s732 + $0xc0] sm:$0xff]
    %v758 = vld [vmem:[%s732 + $0xc8] sm:$0xff]
    %v759 = vld [vmem:[%s732 + $0xd0] sm:$0xff]
    %v760 = vld [vmem:[%s732 + $0xd8] sm:$0xff]
    %v761 = vld [vmem:[%s732 + $0xe0] sm:$0xff]
    %v762 = vld [vmem:[%s732 + $0xe8] sm:$0xff]
    %v763 = vld [vmem:[%s732 + $0xf0] sm:$0xff]
    %v764 = vld [vmem:[%s732 + $0xf8] sm:$0xff]
    %s765 = scalar_lea.vmem [#allocation10], 6
    %v766 = vld [vmem:[%s765] sm:$0x3]
    %v768 = vlaneseq
    %v769 = vshrl.u32 %v768, 7
    %v770 = vsub.s32 0, %v769
    %v771 = vrot.slane %v766, %v770
    %v772 = vlaneseq
    %v773 = vshrl.u32 %v772, 7
    %v774 = vsub.s32 1, %v773
    %v775 = vrot.slane %v766, %v774
    %v810 = vunpack.c.l.b16 %v733
    %v811 = vunpack.c.h.b16 %v733
    %v812 = vunpack.c.l.b16 %v734
    %v813 = vunpack.c.h.b16 %v734
    %v814 = vunpack.c.l.b16 %v735
    %v815 = vunpack.c.h.b16 %v735
    %v816 = vunpack.c.l.b16 %v736
    %v817 = vunpack.c.h.b16 %v736
    %v818 = vunpack.c.l.b16 %v737
    %v819 = vunpack.c.h.b16 %v737
    %v820 = vunpack.c.l.b16 %v738
    %v821 = vunpack.c.h.b16 %v738
    %v822 = vunpack.c.l.b16 %v739
    %v823 = vunpack.c.h.b16 %v739
    %v824 = vunpack.c.l.b16 %v740
    %v825 = vunpack.c.h.b16 %v740
    %v826 = vunpack.c.l.b16 %v741
    %v827 = vunpack.c.h.b16 %v741
    %v828 = vunpack.c.l.b16 %v742
    %v829 = vunpack.c.h.b16 %v742
    %v830 = vunpack.c.l.b16 %v743
    %v831 = vunpack.c.h.b16 %v743
    %v832 = vunpack.c.l.b16 %v744
    %v833 = vunpack.c.h.b16 %v744
    %v834 = vunpack.c.l.b16 %v745
    %v835 = vunpack.c.h.b16 %v745
    %v836 = vunpack.c.l.b16 %v746
    %v837 = vunpack.c.h.b16 %v746
    %v838 = vunpack.c.l.b16 %v747
    %v839 = vunpack.c.h.b16 %v747
    %v840 = vunpack.c.l.b16 %v748
    %v841 = vunpack.c.h.b16 %v748
    %v842 = vunpack.c.l.b16 %v749
    %v843 = vunpack.c.h.b16 %v749
    %v844 = vunpack.c.l.b16 %v750
    %v845 = vunpack.c.h.b16 %v750
    %v846 = vunpack.c.l.b16 %v751
    %v847 = vunpack.c.h.b16 %v751
    %v848 = vunpack.c.l.b16 %v752
    %v849 = vunpack.c.h.b16 %v752
    %v850 = vunpack.c.l.b16 %v753
    %v851 = vunpack.c.h.b16 %v753
    %v852 = vunpack.c.l.b16 %v754
    %v853 = vunpack.c.h.b16 %v754
    %v854 = vunpack.c.l.b16 %v755
    %v855 = vunpack.c.h.b16 %v755
    %v856 = vunpack.c.l.b16 %v756
    %v857 = vunpack.c.h.b16 %v756
    %v858 = vunpack.c.l.b16 %v757
    %v859 = vunpack.c.h.b16 %v757
    %v860 = vunpack.c.l.b16 %v758
    %v861 = vunpack.c.h.b16 %v758
    %v862 = vunpack.c.l.b16 %v759
    %v863 = vunpack.c.h.b16 %v759
    %v864 = vunpack.c.l.b16 %v760
    %v865 = vunpack.c.h.b16 %v760
    %v866 = vunpack.c.l.b16 %v761
    %v867 = vunpack.c.h.b16 %v761
    %v868 = vunpack.c.l.b16 %v762
    %v869 = vunpack.c.h.b16 %v762
    %v870 = vunpack.c.l.b16 %v763
    %v871 = vunpack.c.h.b16 %v763
    %v872 = vunpack.c.l.b16 %v764
    %v873 = vunpack.c.h.b16 %v764
    %v874 = vpack.c.b16 %v812, %v810
    %v875 = vpack.c.b16 %v813, %v811
    %v876 = vpack.c.b16 %v816, %v814
    %v877 = vpack.c.b16 %v817, %v815
    %v878 = vpack.c.b16 %v820, %v818
    %v879 = vpack.c.b16 %v821, %v819
    %v880 = vpack.c.b16 %v824, %v822
    %v881 = vpack.c.b16 %v825, %v823
    %v882 = vpack.c.b16 %v828, %v826
    %v883 = vpack.c.b16 %v829, %v827
    %v884 = vpack.c.b16 %v832, %v830
    %v885 = vpack.c.b16 %v833, %v831
    %v886 = vpack.c.b16 %v836, %v834
    %v887 = vpack.c.b16 %v837, %v835
    %v888 = vpack.c.b16 %v840, %v838
    %v889 = vpack.c.b16 %v841, %v839
    %v890 = vpack.c.b16 %v844, %v842
    %v891 = vpack.c.b16 %v845, %v843
    %v892 = vpack.c.b16 %v848, %v846
    %v893 = vpack.c.b16 %v849, %v847
    %v894 = vpack.c.b16 %v852, %v850
    %v895 = vpack.c.b16 %v853, %v851
    %v896 = vpack.c.b16 %v856, %v854
    %v897 = vpack.c.b16 %v857, %v855
    %v898 = vpack.c.b16 %v860, %v858
    %v899 = vpack.c.b16 %v861, %v859
    %v900 = vpack.c.b16 %v864, %v862
    %v901 = vpack.c.b16 %v865, %v863
    %v902 = vpack.c.b16 %v868, %v866
    %v903 = vpack.c.b16 %v869, %v867
    %v904 = vpack.c.b16 %v872, %v870
    %v905 = vpack.c.b16 %v873, %v871
    %938 = vmatprep.subr.bf16.mxu0 %v875
    %939 = vmatpush1.bf16.msra.mxu0 %v874
    %940 = vmatprep.subr.bf16.mxu0 %v877
    %941 = vmatpush1.bf16.msra.mxu0 %v876
    %942 = vmatprep.subr.bf16.mxu0 %v879
    %943 = vmatpush1.bf16.msra.mxu0 %v878
    %944 = vmatprep.subr.bf16.mxu0 %v881
    %945 = vmatpush1.bf16.msra.mxu0 %v880
    %946 = vmatprep.subr.bf16.mxu0 %v883
    %947 = vmatpush1.bf16.msra.mxu0 %v882
    %948 = vmatprep.subr.bf16.mxu0 %v885
    %949 = vmatpush1.bf16.msra.mxu0 %v884
    %950 = vmatprep.subr.bf16.mxu0 %v887
    %951 = vmatpush1.bf16.msra.mxu0 %v886
    %952 = vmatprep.subr.bf16.mxu0 %v889
    %953 = vmatpush1.bf16.msra.mxu0 %v888
    %954 = vmatprep.subr.bf16.mxu0 %v891
    %955 = vmatpush1.bf16.msra.mxu0 %v890
    %956 = vmatprep.subr.bf16.mxu0 %v893
    %957 = vmatpush1.bf16.msra.mxu0 %v892
    %958 = vmatprep.subr.bf16.mxu0 %v895
    %959 = vmatpush1.bf16.msra.mxu0 %v894
    %960 = vmatprep.subr.bf16.mxu0 %v897
    %961 = vmatpush1.bf16.msra.mxu0 %v896
    %962 = vmatprep.subr.bf16.mxu0 %v899
    %963 = vmatpush1.bf16.msra.mxu0 %v898
    %964 = vmatprep.subr.bf16.mxu0 %v901
    %965 = vmatpush1.bf16.msra.mxu0 %v900
    %966 = vmatprep.subr.bf16.mxu0 %v903
    %967 = vmatpush1.bf16.msra.mxu0 %v902
    %968 = vmatprep.subr.bf16.mxu0 %v905
    %969 = vmatpush1.bf16.msra.mxu0 %v904
    %970 = vmatprep.mubr.bf16.mxu0 %v731
    %971 = vmatmul.mubr.bf16.gmra.mrb[0].mxu0 %v730
    %v972 = vpop.f32.mrb[0].mxu0
    %v973 = vadd.f32 %v771, %v972
    %v974 = vpop.f32.mrb[0].mxu0
    %v975 = vadd.f32 %v775, %v974
    %v976 = vpop.f32.mrb[0].mxu0
    %v977 = vpop.f32.mrb[0].mxu0
    %978 = vdwg.mxu0
    %v979 = vpack.c.bf16 %v973, %v973
    %v980 = vpack.c.bf16 %v975, %v975
    %v981 = vtanh.bf16.pop %v979
    %v982 = vtanh.bf16.pop %v980
    %s983 = scalar_lea.vmem [#allocation7], 768
    %v984 = vld [vmem:[%s983] sm:$0xff]
    %v985 = vld [vmem:[%s983 + $0x8] sm:$0xff]
    %v986 = vld [vmem:[%s983 + $0x10] sm:$0xff]
    %v987 = vld [vmem:[%s983 + $0x18] sm:$0xff]
    %v988 = vld [vmem:[%s983 + $0x20] sm:$0xff]
    %v989 = vld [vmem:[%s983 + $0x28] sm:$0xff]
    %v990 = vld [vmem:[%s983 + $0x30] sm:$0xff]
    %v991 = vld [vmem:[%s983 + $0x38] sm:$0xff]
    %v992 = vld [vmem:[%s983 + $0x40] sm:$0xff]
    %v993 = vld [vmem:[%s983 + $0x48] sm:$0xff]
    %v994 = vld [vmem:[%s983 + $0x50] sm:$0xff]
    %v995 = vld [vmem:[%s983 + $0x58] sm:$0xff]
    %v996 = vld [vmem:[%s983 + $0x60] sm:$0xff]
    %v997 = vld [vmem:[%s983 + $0x68] sm:$0xff]
    %v998 = vld [vmem:[%s983 + $0x70] sm:$0xff]
    %v999 = vld [vmem:[%s983 + $0x78] sm:$0xff]
    %v1000 = vld [vmem:[%s983 + $0x80] sm:$0xff]
    %v1001 = vld [vmem:[%s983 + $0x88] sm:$0xff]
    %v1002 = vld [vmem:[%s983 + $0x90] sm:$0xff]
    %v1003 = vld [vmem:[%s983 + $0x98] sm:$0xff]
    %v1004 = vld [vmem:[%s983 + $0xa0] sm:$0xff]
    %v1005 = vld [vmem:[%s983 + $0xa8] sm:$0xff]
    %v1006 = vld [vmem:[%s983 + $0xb0] sm:$0xff]
    %v1007 = vld [vmem:[%s983 + $0xb8] sm:$0xff]
    %v1008 = vld [vmem:[%s983 + $0xc0] sm:$0xff]
    %v1009 = vld [vmem:[%s983 + $0xc8] sm:$0xff]
    %v1010 = vld [vmem:[%s983 + $0xd0] sm:$0xff]
    %v1011 = vld [vmem:[%s983 + $0xd8] sm:$0xff]
    %v1012 = vld [vmem:[%s983 + $0xe0] sm:$0xff]
    %v1013 = vld [vmem:[%s983 + $0xe8] sm:$0xff]
    %v1014 = vld [vmem:[%s983 + $0xf0] sm:$0xff]
    %v1015 = vld [vmem:[%s983 + $0xf8] sm:$0xff]
    %s1016 = scalar_lea.vmem [#allocation10], 8
    %v1017 = vld [vmem:[%s1016] sm:$0x3]
    %v1019 = vlaneseq
    %v1020 = vshrl.u32 %v1019, 7
    %v1021 = vsub.s32 0, %v1020
    %v1022 = vrot.slane %v1017, %v1021
    %v1023 = vlaneseq
    %v1024 = vshrl.u32 %v1023, 7
    %v1025 = vsub.s32 1, %v1024
    %v1026 = vrot.slane %v1017, %v1025
    %v1061 = vunpack.c.l.b16 %v984
    %v1062 = vunpack.c.h.b16 %v984
    %v1063 = vunpack.c.l.b16 %v985
    %v1064 = vunpack.c.h.b16 %v985
    %v1065 = vunpack.c.l.b16 %v986
    %v1066 = vunpack.c.h.b16 %v986
    %v1067 = vunpack.c.l.b16 %v987
    %v1068 = vunpack.c.h.b16 %v987
    %v1069 = vunpack.c.l.b16 %v988
    %v1070 = vunpack.c.h.b16 %v988
    %v1071 = vunpack.c.l.b16 %v989
    %v1072 = vunpack.c.h.b16 %v989
    %v1073 = vunpack.c.l.b16 %v990
    %v1074 = vunpack.c.h.b16 %v990
    %v1075 = vunpack.c.l.b16 %v991
    %v1076 = vunpack.c.h.b16 %v991
    %v1077 = vunpack.c.l.b16 %v992
    %v1078 = vunpack.c.h.b16 %v992
    %v1079 = vunpack.c.l.b16 %v993
    %v1080 = vunpack.c.h.b16 %v993
    %v1081 = vunpack.c.l.b16 %v994
    %v1082 = vunpack.c.h.b16 %v994
    %v1083 = vunpack.c.l.b16 %v995
    %v1084 = vunpack.c.h.b16 %v995
    %v1085 = vunpack.c.l.b16 %v996
    %v1086 = vunpack.c.h.b16 %v996
    %v1087 = vunpack.c.l.b16 %v997
    %v1088 = vunpack.c.h.b16 %v997
    %v1089 = vunpack.c.l.b16 %v998
    %v1090 = vunpack.c.h.b16 %v998
    %v1091 = vunpack.c.l.b16 %v999
    %v1092 = vunpack.c.h.b16 %v999
    %v1093 = vunpack.c.l.b16 %v1000
    %v1094 = vunpack.c.h.b16 %v1000
    %v1095 = vunpack.c.l.b16 %v1001
    %v1096 = vunpack.c.h.b16 %v1001
    %v1097 = vunpack.c.l.b16 %v1002
    %v1098 = vunpack.c.h.b16 %v1002
    %v1099 = vunpack.c.l.b16 %v1003
    %v1100 = vunpack.c.h.b16 %v1003
    %v1101 = vunpack.c.l.b16 %v1004
    %v1102 = vunpack.c.h.b16 %v1004
    %v1103 = vunpack.c.l.b16 %v1005
    %v1104 = vunpack.c.h.b16 %v1005
    %v1105 = vunpack.c.l.b16 %v1006
    %v1106 = vunpack.c.h.b16 %v1006
    %v1107 = vunpack.c.l.b16 %v1007
    %v1108 = vunpack.c.h.b16 %v1007
    %v1109 = vunpack.c.l.b16 %v1008
    %v1110 = vunpack.c.h.b16 %v1008
    %v1111 = vunpack.c.l.b16 %v1009
    %v1112 = vunpack.c.h.b16 %v1009
    %v1113 = vunpack.c.l.b16 %v1010
    %v1114 = vunpack.c.h.b16 %v1010
    %v1115 = vunpack.c.l.b16 %v1011
    %v1116 = vunpack.c.h.b16 %v1011
    %v1117 = vunpack.c.l.b16 %v1012
    %v1118 = vunpack.c.h.b16 %v1012
    %v1119 = vunpack.c.l.b16 %v1013
    %v1120 = vunpack.c.h.b16 %v1013
    %v1121 = vunpack.c.l.b16 %v1014
    %v1122 = vunpack.c.h.b16 %v1014
    %v1123 = vunpack.c.l.b16 %v1015
    %v1124 = vunpack.c.h.b16 %v1015
    %v1125 = vpack.c.b16 %v1063, %v1061
    %v1126 = vpack.c.b16 %v1064, %v1062
    %v1127 = vpack.c.b16 %v1067, %v1065
    %v1128 = vpack.c.b16 %v1068, %v1066
    %v1129 = vpack.c.b16 %v1071, %v1069
    %v1130 = vpack.c.b16 %v1072, %v1070
    %v1131 = vpack.c.b16 %v1075, %v1073
    %v1132 = vpack.c.b16 %v1076, %v1074
    %v1133 = vpack.c.b16 %v1079, %v1077
    %v1134 = vpack.c.b16 %v1080, %v1078
    %v1135 = vpack.c.b16 %v1083, %v1081
    %v1136 = vpack.c.b16 %v1084, %v1082
    %v1137 = vpack.c.b16 %v1087, %v1085
    %v1138 = vpack.c.b16 %v1088, %v1086
    %v1139 = vpack.c.b16 %v1091, %v1089
    %v1140 = vpack.c.b16 %v1092, %v1090
    %v1141 = vpack.c.b16 %v1095, %v1093
    %v1142 = vpack.c.b16 %v1096, %v1094
    %v1143 = vpack.c.b16 %v1099, %v1097
    %v1144 = vpack.c.b16 %v1100, %v1098
    %v1145 = vpack.c.b16 %v1103, %v1101
    %v1146 = vpack.c.b16 %v1104, %v1102
    %v1147 = vpack.c.b16 %v1107, %v1105
    %v1148 = vpack.c.b16 %v1108, %v1106
    %v1149 = vpack.c.b16 %v1111, %v1109
    %v1150 = vpack.c.b16 %v1112, %v1110
    %v1151 = vpack.c.b16 %v1115, %v1113
    %v1152 = vpack.c.b16 %v1116, %v1114
    %v1153 = vpack.c.b16 %v1119, %v1117
    %v1154 = vpack.c.b16 %v1120, %v1118
    %v1155 = vpack.c.b16 %v1123, %v1121
    %v1156 = vpack.c.b16 %v1124, %v1122
    %1189 = vmatprep.subr.bf16.mxu0 %v1126
    %1190 = vmatpush1.bf16.msra.mxu0 %v1125
    %1191 = vmatprep.subr.bf16.mxu0 %v1128
    %1192 = vmatpush1.bf16.msra.mxu0 %v1127
    %1193 = vmatprep.subr.bf16.mxu0 %v1130
    %1194 = vmatpush1.bf16.msra.mxu0 %v1129
    %1195 = vmatprep.subr.bf16.mxu0 %v1132
    %1196 = vmatpush1.bf16.msra.mxu0 %v1131
    %1197 = vmatprep.subr.bf16.mxu0 %v1134
    %1198 = vmatpush1.bf16.msra.mxu0 %v1133
    %1199 = vmatprep.subr.bf16.mxu0 %v1136
    %1200 = vmatpush1.bf16.msra.mxu0 %v1135
    %1201 = vmatprep.subr.bf16.mxu0 %v1138
    %1202 = vmatpush1.bf16.msra.mxu0 %v1137
    %1203 = vmatprep.subr.bf16.mxu0 %v1140
    %1204 = vmatpush1.bf16.msra.mxu0 %v1139
    %1205 = vmatprep.subr.bf16.mxu0 %v1142
    %1206 = vmatpush1.bf16.msra.mxu0 %v1141
    %1207 = vmatprep.subr.bf16.mxu0 %v1144
    %1208 = vmatpush1.bf16.msra.mxu0 %v1143
    %1209 = vmatprep.subr.bf16.mxu0 %v1146
    %1210 = vmatpush1.bf16.msra.mxu0 %v1145
    %1211 = vmatprep.subr.bf16.mxu0 %v1148
    %1212 = vmatpush1.bf16.msra.mxu0 %v1147
    %1213 = vmatprep.subr.bf16.mxu0 %v1150
    %1214 = vmatpush1.bf16.msra.mxu0 %v1149
    %1215 = vmatprep.subr.bf16.mxu0 %v1152
    %1216 = vmatpush1.bf16.msra.mxu0 %v1151
    %1217 = vmatprep.subr.bf16.mxu0 %v1154
    %1218 = vmatpush1.bf16.msra.mxu0 %v1153
    %1219 = vmatprep.subr.bf16.mxu0 %v1156
    %1220 = vmatpush1.bf16.msra.mxu0 %v1155
    %1221 = vmatprep.mubr.bf16.mxu0 %v982
    %1222 = vmatmul.mubr.bf16.gmra.mrb[0].mxu0 %v981
    %v1223 = vpop.f32.mrb[0].mxu0
    %v1224 = vadd.f32 %v1022, %v1223
    %v1225 = vpop.f32.mrb[0].mxu0
    %v1226 = vadd.f32 %v1026, %v1225
    %v1227 = vpop.f32.mrb[0].mxu0
    %v1228 = vpop.f32.mrb[0].mxu0
    %1229 = vdwg.mxu0
    %v1230 = vpack.c.bf16 %v1224, %v1224
    %v1231 = vpack.c.bf16 %v1226, %v1226
    %v1232 = vtanh.bf16.pop %v1230
    %v1233 = vtanh.bf16.pop %v1231
    %s1234 = scalar_lea.vmem [#allocation7], 1024
    %v1235 = vld [vmem:[%s1234] sm:$0xff]
    %v1236 = vld [vmem:[%s1234 + $0x8] sm:$0xff]
    %v1237 = vld [vmem:[%s1234 + $0x10] sm:$0xff]
    %v1238 = vld [vmem:[%s1234 + $0x18] sm:$0xff]
    %v1239 = vld [vmem:[%s1234 + $0x20] sm:$0xff]
    %v1240 = vld [vmem:[%s1234 + $0x28] sm:$0xff]
    %v1241 = vld [vmem:[%s1234 + $0x30] sm:$0xff]
    %v1242 = vld [vmem:[%s1234 + $0x38] sm:$0xff]
    %v1243 = vld [vmem:[%s1234 + $0x40] sm:$0xff]
    %v1244 = vld [vmem:[%s1234 + $0x48] sm:$0xff]
    %v1245 = vld [vmem:[%s1234 + $0x50] sm:$0xff]
    %v1246 = vld [vmem:[%s1234 + $0x58] sm:$0xff]
    %v1247 = vld [vmem:[%s1234 + $0x60] sm:$0xff]
    %v1248 = vld [vmem:[%s1234 + $0x68] sm:$0xff]
    %v1249 = vld [vmem:[%s1234 + $0x70] sm:$0xff]
    %v1250 = vld [vmem:[%s1234 + $0x78] sm:$0xff]
    %v1251 = vld [vmem:[%s1234 + $0x80] sm:$0xff]
    %v1252 = vld [vmem:[%s1234 + $0x88] sm:$0xff]
    %v1253 = vld [vmem:[%s1234 + $0x90] sm:$0xff]
    %v1254 = vld [vmem:[%s1234 + $0x98] sm:$0xff]
    %v1255 = vld [vmem:[%s1234 + $0xa0] sm:$0xff]
    %v1256 = vld [vmem:[%s1234 + $0xa8] sm:$0xff]
    %v1257 = vld [vmem:[%s1234 + $0xb0] sm:$0xff]
    %v1258 = vld [vmem:[%s1234 + $0xb8] sm:$0xff]
    %v1259 = vld [vmem:[%s1234 + $0xc0] sm:$0xff]
    %v1260 = vld [vmem:[%s1234 + $0xc8] sm:$0xff]
    %v1261 = vld [vmem:[%s1234 + $0xd0] sm:$0xff]
    %v1262 = vld [vmem:[%s1234 + $0xd8] sm:$0xff]
    %v1263 = vld [vmem:[%s1234 + $0xe0] sm:$0xff]
    %v1264 = vld [vmem:[%s1234 + $0xe8] sm:$0xff]
    %v1265 = vld [vmem:[%s1234 + $0xf0] sm:$0xff]
    %v1266 = vld [vmem:[%s1234 + $0xf8] sm:$0xff]
    %s1267 = scalar_lea.vmem [#allocation10], 10
    %v1268 = vld [vmem:[%s1267] sm:$0x3]
    %v1270 = vlaneseq
    %v1271 = vshrl.u32 %v1270, 7
    %v1272 = vsub.s32 0, %v1271
    %v1273 = vrot.slane %v1268, %v1272
    %v1274 = vlaneseq
    %v1275 = vshrl.u32 %v1274, 7
    %v1276 = vsub.s32 1, %v1275
    %v1277 = vrot.slane %v1268, %v1276
    %v1312 = vunpack.c.l.b16 %v1235
    %v1313 = vunpack.c.h.b16 %v1235
    %v1314 = vunpack.c.l.b16 %v1236
    %v1315 = vunpack.c.h.b16 %v1236
    %v1316 = vunpack.c.l.b16 %v1237
    %v1317 = vunpack.c.h.b16 %v1237
    %v1318 = vunpack.c.l.b16 %v1238
    %v1319 = vunpack.c.h.b16 %v1238
    %v1320 = vunpack.c.l.b16 %v1239
    %v1321 = vunpack.c.h.b16 %v1239
    %v1322 = vunpack.c.l.b16 %v1240
    %v1323 = vunpack.c.h.b16 %v1240
    %v1324 = vunpack.c.l.b16 %v1241
    %v1325 = vunpack.c.h.b16 %v1241
    %v1326 = vunpack.c.l.b16 %v1242
    %v1327 = vunpack.c.h.b16 %v1242
    %v1328 = vunpack.c.l.b16 %v1243
    %v1329 = vunpack.c.h.b16 %v1243
    %v1330 = vunpack.c.l.b16 %v1244
    %v1331 = vunpack.c.h.b16 %v1244
    %v1332 = vunpack.c.l.b16 %v1245
    %v1333 = vunpack.c.h.b16 %v1245
    %v1334 = vunpack.c.l.b16 %v1246
    %v1335 = vunpack.c.h.b16 %v1246
    %v1336 = vunpack.c.l.b16 %v1247
    %v1337 = vunpack.c.h.b16 %v1247
    %v1338 = vunpack.c.l.b16 %v1248
    %v1339 = vunpack.c.h.b16 %v1248
    %v1340 = vunpack.c.l.b16 %v1249
    %v1341 = vunpack.c.h.b16 %v1249
    %v1342 = vunpack.c.l.b16 %v1250
    %v1343 = vunpack.c.h.b16 %v1250
    %v1344 = vunpack.c.l.b16 %v1251
    %v1345 = vunpack.c.h.b16 %v1251
    %v1346 = vunpack.c.l.b16 %v1252
    %v1347 = vunpack.c.h.b16 %v1252
    %v1348 = vunpack.c.l.b16 %v1253
    %v1349 = vunpack.c.h.b16 %v1253
    %v1350 = vunpack.c.l.b16 %v1254
    %v1351 = vunpack.c.h.b16 %v1254
    %v1352 = vunpack.c.l.b16 %v1255
    %v1353 = vunpack.c.h.b16 %v1255
    %v1354 = vunpack.c.l.b16 %v1256
    %v1355 = vunpack.c.h.b16 %v1256
    %v1356 = vunpack.c.l.b16 %v1257
    %v1357 = vunpack.c.h.b16 %v1257
    %v1358 = vunpack.c.l.b16 %v1258
    %v1359 = vunpack.c.h.b16 %v1258
    %v1360 = vunpack.c.l.b16 %v1259
    %v1361 = vunpack.c.h.b16 %v1259
    %v1362 = vunpack.c.l.b16 %v1260
    %v1363 = vunpack.c.h.b16 %v1260
    %v1364 = vunpack.c.l.b16 %v1261
    %v1365 = vunpack.c.h.b16 %v1261
    %v1366 = vunpack.c.l.b16 %v1262
    %v1367 = vunpack.c.h.b16 %v1262
    %v1368 = vunpack.c.l.b16 %v1263
    %v1369 = vunpack.c.h.b16 %v1263
    %v1370 = vunpack.c.l.b16 %v1264
    %v1371 = vunpack.c.h.b16 %v1264
    %v1372 = vunpack.c.l.b16 %v1265
    %v1373 = vunpack.c.h.b16 %v1265
    %v1374 = vunpack.c.l.b16 %v1266
    %v1375 = vunpack.c.h.b16 %v1266
    %v1376 = vpack.c.b16 %v1314, %v1312
    %v1377 = vpack.c.b16 %v1315, %v1313
    %v1378 = vpack.c.b16 %v1318, %v1316
    %v1379 = vpack.c.b16 %v1319, %v1317
    %v1380 = vpack.c.b16 %v1322, %v1320
    %v1381 = vpack.c.b16 %v1323, %v1321
    %v1382 = vpack.c.b16 %v1326, %v1324
    %v1383 = vpack.c.b16 %v1327, %v1325
    %v1384 = vpack.c.b16 %v1330, %v1328
    %v1385 = vpack.c.b16 %v1331, %v1329
    %v1386 = vpack.c.b16 %v1334, %v1332
    %v1387 = vpack.c.b16 %v1335, %v1333
    %v1388 = vpack.c.b16 %v1338, %v1336
    %v1389 = vpack.c.b16 %v1339, %v1337
    %v1390 = vpack.c.b16 %v1342, %v1340
    %v1391 = vpack.c.b16 %v1343, %v1341
    %v1392 = vpack.c.b16 %v1346, %v1344
    %v1393 = vpack.c.b16 %v1347, %v1345
    %v1394 = vpack.c.b16 %v1350, %v1348
    %v1395 = vpack.c.b16 %v1351, %v1349
    %v1396 = vpack.c.b16 %v1354, %v1352
    %v1397 = vpack.c.b16 %v1355, %v1353
    %v1398 = vpack.c.b16 %v1358, %v1356
    %v1399 = vpack.c.b16 %v1359, %v1357
    %v1400 = vpack.c.b16 %v1362, %v1360
    %v1401 = vpack.c.b16 %v1363, %v1361
    %v1402 = vpack.c.b16 %v1366, %v1364
    %v1403 = vpack.c.b16 %v1367, %v1365
    %v1404 = vpack.c.b16 %v1370, %v1368
    %v1405 = vpack.c.b16 %v1371, %v1369
    %v1406 = vpack.c.b16 %v1374, %v1372
    %v1407 = vpack.c.b16 %v1375, %v1373
    %1440 = vmatprep.subr.bf16.mxu0 %v1377
    %1441 = vmatpush1.bf16.msra.mxu0 %v1376
    %1442 = vmatprep.subr.bf16.mxu0 %v1379
    %1443 = vmatpush1.bf16.msra.mxu0 %v1378
    %1444 = vmatprep.subr.bf16.mxu0 %v1381
    %1445 = vmatpush1.bf16.msra.mxu0 %v1380
    %1446 = vmatprep.subr.bf16.mxu0 %v1383
    %1447 = vmatpush1.bf16.msra.mxu0 %v1382
    %1448 = vmatprep.subr.bf16.mxu0 %v1385
    %1449 = vmatpush1.bf16.msra.mxu0 %v1384
    %1450 = vmatprep.subr.bf16.mxu0 %v1387
    %1451 = vmatpush1.bf16.msra.mxu0 %v1386
    %1452 = vmatprep.subr.bf16.mxu0 %v1389
    %1453 = vmatpush1.bf16.msra.mxu0 %v1388
    %1454 = vmatprep.subr.bf16.mxu0 %v1391
    %1455 = vmatpush1.bf16.msra.mxu0 %v1390
    %1456 = vmatprep.subr.bf16.mxu0 %v1393
    %1457 = vmatpush1.bf16.msra.mxu0 %v1392
    %1458 = vmatprep.subr.bf16.mxu0 %v1395
    %1459 = vmatpush1.bf16.msra.mxu0 %v1394
    %1460 = vmatprep.subr.bf16.mxu0 %v1397
    %1461 = vmatpush1.bf16.msra.mxu0 %v1396
    %1462 = vmatprep.subr.bf16.mxu0 %v1399
    %1463 = vmatpush1.bf16.msra.mxu0 %v1398
    %1464 = vmatprep.subr.bf16.mxu0 %v1401
    %1465 = vmatpush1.bf16.msra.mxu0 %v1400
    %1466 = vmatprep.subr.bf16.mxu0 %v1403
    %1467 = vmatpush1.bf16.msra.mxu0 %v1402
    %1468 = vmatprep.subr.bf16.mxu0 %v1405
    %1469 = vmatpush1.bf16.msra.mxu0 %v1404
    %1470 = vmatprep.subr.bf16.mxu0 %v1407
    %1471 = vmatpush1.bf16.msra.mxu0 %v1406
    %1472 = vmatprep.mubr.bf16.mxu0 %v1233
    %1473 = vmatmul.mubr.bf16.gmra.mrb[0].mxu0 %v1232
    %v1474 = vpop.f32.mrb[0].mxu0
    %v1475 = vadd.f32 %v1273, %v1474
    %v1476 = vpop.f32.mrb[0].mxu0
    %v1477 = vadd.f32 %v1277, %v1476
    %v1478 = vpop.f32.mrb[0].mxu0
    %v1479 = vpop.f32.mrb[0].mxu0
    %1480 = vdwg.mxu0
    %v1481 = vpack.c.bf16 %v1475, %v1475
    %v1482 = vpack.c.bf16 %v1477, %v1477
    %v1483 = vmax.bf16 %v1481, 0
    %v1484 = vmax.bf16 %v1482, 0
    %s1485 = scalar_lea.vmem [#allocation7], 1280
    %v1486 = vld [vmem:[%s1485] sm:$0xff]
    %v1487 = vld [vmem:[%s1485 + $0x8] sm:$0xff]
    %v1488 = vld [vmem:[%s1485 + $0x10] sm:$0xff]
    %v1489 = vld [vmem:[%s1485 + $0x18] sm:$0xff]
    %v1490 = vld [vmem:[%s1485 + $0x20] sm:$0xff]
    %v1491 = vld [vmem:[%s1485 + $0x28] sm:$0xff]
    %v1492 = vld [vmem:[%s1485 + $0x30] sm:$0xff]
    %v1493 = vld [vmem:[%s1485 + $0x38] sm:$0xff]
    %v1494 = vld [vmem:[%s1485 + $0x40] sm:$0xff]
    %v1495 = vld [vmem:[%s1485 + $0x48] sm:$0xff]
    %v1496 = vld [vmem:[%s1485 + $0x50] sm:$0xff]
    %v1497 = vld [vmem:[%s1485 + $0x58] sm:$0xff]
    %v1498 = vld [vmem:[%s1485 + $0x60] sm:$0xff]
    %v1499 = vld [vmem:[%s1485 + $0x68] sm:$0xff]
    %v1500 = vld [vmem:[%s1485 + $0x70] sm:$0xff]
    %v1501 = vld [vmem:[%s1485 + $0x78] sm:$0xff]
    %v1502 = vld [vmem:[%s1485 + $0x80] sm:$0xff]
    %v1503 = vld [vmem:[%s1485 + $0x88] sm:$0xff]
    %v1504 = vld [vmem:[%s1485 + $0x90] sm:$0xff]
    %v1505 = vld [vmem:[%s1485 + $0x98] sm:$0xff]
    %v1506 = vld [vmem:[%s1485 + $0xa0] sm:$0xff]
    %v1507 = vld [vmem:[%s1485 + $0xa8] sm:$0xff]
    %v1508 = vld [vmem:[%s1485 + $0xb0] sm:$0xff]
    %v1509 = vld [vmem:[%s1485 + $0xb8] sm:$0xff]
    %v1510 = vld [vmem:[%s1485 + $0xc0] sm:$0xff]
    %v1511 = vld [vmem:[%s1485 + $0xc8] sm:$0xff]
    %v1512 = vld [vmem:[%s1485 + $0xd0] sm:$0xff]
    %v1513 = vld [vmem:[%s1485 + $0xd8] sm:$0xff]
    %v1514 = vld [vmem:[%s1485 + $0xe0] sm:$0xff]
    %v1515 = vld [vmem:[%s1485 + $0xe8] sm:$0xff]
    %v1516 = vld [vmem:[%s1485 + $0xf0] sm:$0xff]
    %v1517 = vld [vmem:[%s1485 + $0xf8] sm:$0xff]
    %s1518 = scalar_lea.vmem [#allocation10], 12
    %v1519 = vld [vmem:[%s1518] sm:$0x3]
    %v1521 = vlaneseq
    %v1522 = vshrl.u32 %v1521, 7
    %v1523 = vsub.s32 0, %v1522
    %v1524 = vrot.slane %v1519, %v1523
    %v1525 = vlaneseq
    %v1526 = vshrl.u32 %v1525, 7
    %v1527 = vsub.s32 1, %v1526
    %v1528 = vrot.slane %v1519, %v1527
    %v1563 = vunpack.c.l.b16 %v1486
    %v1564 = vunpack.c.h.b16 %v1486
    %v1565 = vunpack.c.l.b16 %v1487
    %v1566 = vunpack.c.h.b16 %v1487
    %v1567 = vunpack.c.l.b16 %v1488
    %v1568 = vunpack.c.h.b16 %v1488
    %v1569 = vunpack.c.l.b16 %v1489
    %v1570 = vunpack.c.h.b16 %v1489
    %v1571 = vunpack.c.l.b16 %v1490
    %v1572 = vunpack.c.h.b16 %v1490
    %v1573 = vunpack.c.l.b16 %v1491
    %v1574 = vunpack.c.h.b16 %v1491
    %v1575 = vunpack.c.l.b16 %v1492
    %v1576 = vunpack.c.h.b16 %v1492
    %v1577 = vunpack.c.l.b16 %v1493
    %v1578 = vunpack.c.h.b16 %v1493
    %v1579 = vunpack.c.l.b16 %v1494
    %v1580 = vunpack.c.h.b16 %v1494
    %v1581 = vunpack.c.l.b16 %v1495
    %v1582 = vunpack.c.h.b16 %v1495
    %v1583 = vunpack.c.l.b16 %v1496
    %v1584 = vunpack.c.h.b16 %v1496
    %v1585 = vunpack.c.l.b16 %v1497
    %v1586 = vunpack.c.h.b16 %v1497
    %v1587 = vunpack.c.l.b16 %v1498
    %v1588 = vunpack.c.h.b16 %v1498
    %v1589 = vunpack.c.l.b16 %v1499
    %v1590 = vunpack.c.h.b16 %v1499
    %v1591 = vunpack.c.l.b16 %v1500
    %v1592 = vunpack.c.h.b16 %v1500
    %v1593 = vunpack.c.l.b16 %v1501
    %v1594 = vunpack.c.h.b16 %v1501
    %v1595 = vunpack.c.l.b16 %v1502
    %v1596 = vunpack.c.h.b16 %v1502
    %v1597 = vunpack.c.l.b16 %v1503
    %v1598 = vunpack.c.h.b16 %v1503
    %v1599 = vunpack.c.l.b16 %v1504
    %v1600 = vunpack.c.h.b16 %v1504
    %v1601 = vunpack.c.l.b16 %v1505
    %v1602 = vunpack.c.h.b16 %v1505
    %v1603 = vunpack.c.l.b16 %v1506
    %v1604 = vunpack.c.h.b16 %v1506
    %v1605 = vunpack.c.l.b16 %v1507
    %v1606 = vunpack.c.h.b16 %v1507
    %v1607 = vunpack.c.l.b16 %v1508
    %v1608 = vunpack.c.h.b16 %v1508
    %v1609 = vunpack.c.l.b16 %v1509
    %v1610 = vunpack.c.h.b16 %v1509
    %v1611 = vunpack.c.l.b16 %v1510
    %v1612 = vunpack.c.h.b16 %v1510
    %v1613 = vunpack.c.l.b16 %v1511
    %v1614 = vunpack.c.h.b16 %v1511
    %v1615 = vunpack.c.l.b16 %v1512
    %v1616 = vunpack.c.h.b16 %v1512
    %v1617 = vunpack.c.l.b16 %v1513
    %v1618 = vunpack.c.h.b16 %v1513
    %v1619 = vunpack.c.l.b16 %v1514
    %v1620 = vunpack.c.h.b16 %v1514
    %v1621 = vunpack.c.l.b16 %v1515
    %v1622 = vunpack.c.h.b16 %v1515
    %v1623 = vunpack.c.l.b16 %v1516
    %v1624 = vunpack.c.h.b16 %v1516
    %v1625 = vunpack.c.l.b16 %v1517
    %v1626 = vunpack.c.h.b16 %v1517
    %v1627 = vpack.c.b16 %v1565, %v1563
    %v1628 = vpack.c.b16 %v1566, %v1564
    %v1629 = vpack.c.b16 %v1569, %v1567
    %v1630 = vpack.c.b16 %v1570, %v1568
    %v1631 = vpack.c.b16 %v1573, %v1571
    %v1632 = vpack.c.b16 %v1574, %v1572
    %v1633 = vpack.c.b16 %v1577, %v1575
    %v1634 = vpack.c.b16 %v1578, %v1576
    %v1635 = vpack.c.b16 %v1581, %v1579
    %v1636 = vpack.c.b16 %v1582, %v1580
    %v1637 = vpack.c.b16 %v1585, %v1583
    %v1638 = vpack.c.b16 %v1586, %v1584
    %v1639 = vpack.c.b16 %v1589, %v1587
    %v1640 = vpack.c.b16 %v1590, %v1588
    %v1641 = vpack.c.b16 %v1593, %v1591
    %v1642 = vpack.c.b16 %v1594, %v1592
    %v1643 = vpack.c.b16 %v1597, %v1595
    %v1644 = vpack.c.b16 %v1598, %v1596
    %v1645 = vpack.c.b16 %v1601, %v1599
    %v1646 = vpack.c.b16 %v1602, %v1600
    %v1647 = vpack.c.b16 %v1605, %v1603
    %v1648 = vpack.c.b16 %v1606, %v1604
    %v1649 = vpack.c.b16 %v1609, %v1607
    %v1650 = vpack.c.b16 %v1610, %v1608
    %v1651 = vpack.c.b16 %v1613, %v1611
    %v1652 = vpack.c.b16 %v1614, %v1612
    %v1653 = vpack.c.b16 %v1617, %v1615
    %v1654 = vpack.c.b16 %v1618, %v1616
    %v1655 = vpack.c.b16 %v1621, %v1619
    %v1656 = vpack.c.b16 %v1622, %v1620
    %v1657 = vpack.c.b16 %v1625, %v1623
    %v1658 = vpack.c.b16 %v1626, %v1624
    %1691 = vmatprep.subr.bf16.mxu0 %v1628
    %1692 = vmatpush1.bf16.msra.mxu0 %v1627
    %1693 = vmatprep.subr.bf16.mxu0 %v1630
    %1694 = vmatpush1.bf16.msra.mxu0 %v1629
    %1695 = vmatprep.subr.bf16.mxu0 %v1632
    %1696 = vmatpush1.bf16.msra.mxu0 %v1631
    %1697 = vmatprep.subr.bf16.mxu0 %v1634
    %1698 = vmatpush1.bf16.msra.mxu0 %v1633
    %1699 = vmatprep.subr.bf16.mxu0 %v1636
    %1700 = vmatpush1.bf16.msra.mxu0 %v1635
    %1701 = vmatprep.subr.bf16.mxu0 %v1638
    %1702 = vmatpush1.bf16.msra.mxu0 %v1637
    %1703 = vmatprep.subr.bf16.mxu0 %v1640
    %1704 = vmatpush1.bf16.msra.mxu0 %v1639
    %1705 = vmatprep.subr.bf16.mxu0 %v1642
    %1706 = vmatpush1.bf16.msra.mxu0 %v1641
    %1707 = vmatprep.subr.bf16.mxu0 %v1644
    %1708 = vmatpush1.bf16.msra.mxu0 %v1643
    %1709 = vmatprep.subr.bf16.mxu0 %v1646
    %1710 = vmatpush1.bf16.msra.mxu0 %v1645
    %1711 = vmatprep.subr.bf16.mxu0 %v1648
    %1712 = vmatpush1.bf16.msra.mxu0 %v1647
    %1713 = vmatprep.subr.bf16.mxu0 %v1650
    %1714 = vmatpush1.bf16.msra.mxu0 %v1649
    %1715 = vmatprep.subr.bf16.mxu0 %v1652
    %1716 = vmatpush1.bf16.msra.mxu0 %v1651
    %1717 = vmatprep.subr.bf16.mxu0 %v1654
    %1718 = vmatpush1.bf16.msra.mxu0 %v1653
    %1719 = vmatprep.subr.bf16.mxu0 %v1656
    %1720 = vmatpush1.bf16.msra.mxu0 %v1655
    %1721 = vmatprep.subr.bf16.mxu0 %v1658
    %1722 = vmatpush1.bf16.msra.mxu0 %v1657
    %1723 = vmatprep.mubr.bf16.mxu0 %v1484
    %1724 = vmatmul.mubr.bf16.gmra.mrb[0].mxu0 %v1483
    %v1725 = vpop.f32.mrb[0].mxu0
    %v1726 = vadd.f32 %v1524, %v1725
    %v1727 = vpop.f32.mrb[0].mxu0
    %v1728 = vadd.f32 %v1528, %v1727
    %v1729 = vpop.f32.mrb[0].mxu0
    %v1730 = vpop.f32.mrb[0].mxu0
    %1731 = vdwg.mxu0
    %v1732 = vpack.c.bf16 %v1726, %v1726
    %v1733 = vpack.c.bf16 %v1728, %v1728
    %v1734 = vtanh.bf16.pop %v1732
    %v1735 = vtanh.bf16.pop %v1733
    %s1736 = scalar_lea.vmem [#allocation7], 1536
    %v1737 = vld [vmem:[%s1736] sm:$0xff]
    %v1738 = vld [vmem:[%s1736 + $0x8] sm:$0xff]
    %v1739 = vld [vmem:[%s1736 + $0x10] sm:$0xff]
    %v1740 = vld [vmem:[%s1736 + $0x18] sm:$0xff]
    %v1741 = vld [vmem:[%s1736 + $0x20] sm:$0xff]
    %v1742 = vld [vmem:[%s1736 + $0x28] sm:$0xff]
    %v1743 = vld [vmem:[%s1736 + $0x30] sm:$0xff]
    %v1744 = vld [vmem:[%s1736 + $0x38] sm:$0xff]
    %v1745 = vld [vmem:[%s1736 + $0x40] sm:$0xff]
    %v1746 = vld [vmem:[%s1736 + $0x48] sm:$0xff]
    %v1747 = vld [vmem:[%s1736 + $0x50] sm:$0xff]
    %v1748 = vld [vmem:[%s1736 + $0x58] sm:$0xff]
    %v1749 = vld [vmem:[%s1736 + $0x60] sm:$0xff]
    %v1750 = vld [vmem:[%s1736 + $0x68] sm:$0xff]
    %v1751 = vld [vmem:[%s1736 + $0x70] sm:$0xff]
    %v1752 = vld [vmem:[%s1736 + $0x78] sm:$0xff]
    %v1753 = vld [vmem:[%s1736 + $0x80] sm:$0xff]
    %v1754 = vld [vmem:[%s1736 + $0x88] sm:$0xff]
    %v1755 = vld [vmem:[%s1736 + $0x90] sm:$0xff]
    %v1756 = vld [vmem:[%s1736 + $0x98] sm:$0xff]
    %v1757 = vld [vmem:[%s1736 + $0xa0] sm:$0xff]
    %v1758 = vld [vmem:[%s1736 + $0xa8] sm:$0xff]
    %v1759 = vld [vmem:[%s1736 + $0xb0] sm:$0xff]
    %v1760 = vld [vmem:[%s1736 + $0xb8] sm:$0xff]
    %v1761 = vld [vmem:[%s1736 + $0xc0] sm:$0xff]
    %v1762 = vld [vmem:[%s1736 + $0xc8] sm:$0xff]
    %v1763 = vld [vmem:[%s1736 + $0xd0] sm:$0xff]
    %v1764 = vld [vmem:[%s1736 + $0xd8] sm:$0xff]
    %v1765 = vld [vmem:[%s1736 + $0xe0] sm:$0xff]
    %v1766 = vld [vmem:[%s1736 + $0xe8] sm:$0xff]
    %v1767 = vld [vmem:[%s1736 + $0xf0] sm:$0xff]
    %v1768 = vld [vmem:[%s1736 + $0xf8] sm:$0xff]
    %s1769 = scalar_lea.vmem [#allocation10], 14
    %v1770 = vld [vmem:[%s1769] sm:$0x3]
    %v1772 = vlaneseq
    %v1773 = vshrl.u32 %v1772, 7
    %v1774 = vsub.s32 0, %v1773
    %v1775 = vrot.slane %v1770, %v1774
    %v1776 = vlaneseq
    %v1777 = vshrl.u32 %v1776, 7
    %v1778 = vsub.s32 1, %v1777
    %v1779 = vrot.slane %v1770, %v1778
    %v1814 = vunpack.c.l.b16 %v1737
    %v1815 = vunpack.c.h.b16 %v1737
    %v1816 = vunpack.c.l.b16 %v1738
    %v1817 = vunpack.c.h.b16 %v1738
    %v1818 = vunpack.c.l.b16 %v1739
    %v1819 = vunpack.c.h.b16 %v1739
    %v1820 = vunpack.c.l.b16 %v1740
    %v1821 = vunpack.c.h.b16 %v1740
    %v1822 = vunpack.c.l.b16 %v1741
    %v1823 = vunpack.c.h.b16 %v1741
    %v1824 = vunpack.c.l.b16 %v1742
    %v1825 = vunpack.c.h.b16 %v1742
    %v1826 = vunpack.c.l.b16 %v1743
    %v1827 = vunpack.c.h.b16 %v1743
    %v1828 = vunpack.c.l.b16 %v1744
    %v1829 = vunpack.c.h.b16 %v1744
    %v1830 = vunpack.c.l.b16 %v1745
    %v1831 = vunpack.c.h.b16 %v1745
    %v1832 = vunpack.c.l.b16 %v1746
    %v1833 = vunpack.c.h.b16 %v1746
    %v1834 = vunpack.c.l.b16 %v1747
    %v1835 = vunpack.c.h.b16 %v1747
    %v1836 = vunpack.c.l.b16 %v1748
    %v1837 = vunpack.c.h.b16 %v1748
    %v1838 = vunpack.c.l.b16 %v1749
    %v1839 = vunpack.c.h.b16 %v1749
    %v1840 = vunpack.c.l.b16 %v1750
    %v1841 = vunpack.c.h.b16 %v1750
    %v1842 = vunpack.c.l.b16 %v1751
    %v1843 = vunpack.c.h.b16 %v1751
    %v1844 = vunpack.c.l.b16 %v1752
    %v1845 = vunpack.c.h.b16 %v1752
    %v1846 = vunpack.c.l.b16 %v1753
    %v1847 = vunpack.c.h.b16 %v1753
    %v1848 = vunpack.c.l.b16 %v1754
    %v1849 = vunpack.c.h.b16 %v1754
    %v1850 = vunpack.c.l.b16 %v1755
    %v1851 = vunpack.c.h.b16 %v1755
    %v1852 = vunpack.c.l.b16 %v1756
    %v1853 = vunpack.c.h.b16 %v1756
    %v1854 = vunpack.c.l.b16 %v1757
    %v1855 = vunpack.c.h.b16 %v1757
    %v1856 = vunpack.c.l.b16 %v1758
    %v1857 = vunpack.c.h.b16 %v1758
    %v1858 = vunpack.c.l.b16 %v1759
    %v1859 = vunpack.c.h.b16 %v1759
    %v1860 = vunpack.c.l.b16 %v1760
    %v1861 = vunpack.c.h.b16 %v1760
    %v1862 = vunpack.c.l.b16 %v1761
    %v1863 = vunpack.c.h.b16 %v1761
    %v1864 = vunpack.c.l.b16 %v1762
    %v1865 = vunpack.c.h.b16 %v1762
    %v1866 = vunpack.c.l.b16 %v1763
    %v1867 = vunpack.c.h.b16 %v1763
    %v1868 = vunpack.c.l.b16 %v1764
    %v1869 = vunpack.c.h.b16 %v1764
    %v1870 = vunpack.c.l.b16 %v1765
    %v1871 = vunpack.c.h.b16 %v1765
    %v1872 = vunpack.c.l.b16 %v1766
    %v1873 = vunpack.c.h.b16 %v1766
    %v1874 = vunpack.c.l.b16 %v1767
    %v1875 = vunpack.c.h.b16 %v1767
    %v1876 = vunpack.c.l.b16 %v1768
    %v1877 = vunpack.c.h.b16 %v1768
    %v1878 = vpack.c.b16 %v1816, %v1814
    %v1879 = vpack.c.b16 %v1817, %v1815
    %v1880 = vpack.c.b16 %v1820, %v1818
    %v1881 = vpack.c.b16 %v1821, %v1819
    %v1882 = vpack.c.b16 %v1824, %v1822
    %v1883 = vpack.c.b16 %v1825, %v1823
    %v1884 = vpack.c.b16 %v1828, %v1826
    %v1885 = vpack.c.b16 %v1829, %v1827
    %v1886 = vpack.c.b16 %v1832, %v1830
    %v1887 = vpack.c.b16 %v1833, %v1831
    %v1888 = vpack.c.b16 %v1836, %v1834
    %v1889 = vpack.c.b16 %v1837, %v1835
    %v1890 = vpack.c.b16 %v1840, %v1838
    %v1891 = vpack.c.b16 %v1841, %v1839
    %v1892 = vpack.c.b16 %v1844, %v1842
    %v1893 = vpack.c.b16 %v1845, %v1843
    %v1894 = vpack.c.b16 %v1848, %v1846
    %v1895 = vpack.c.b16 %v1849, %v1847
    %v1896 = vpack.c.b16 %v1852, %v1850
    %v1897 = vpack.c.b16 %v1853, %v1851
    %v1898 = vpack.c.b16 %v1856, %v1854
    %v1899 = vpack.c.b16 %v1857, %v1855
    %v1900 = vpack.c.b16 %v1860, %v1858
    %v1901 = vpack.c.b16 %v1861, %v1859
    %v1902 = vpack.c.b16 %v1864, %v1862
    %v1903 = vpack.c.b16 %v1865, %v1863
    %v1904 = vpack.c.b16 %v1868, %v1866
    %v1905 = vpack.c.b16 %v1869, %v1867
    %v1906 = vpack.c.b16 %v1872, %v1870
    %v1907 = vpack.c.b16 %v1873, %v1871
    %v1908 = vpack.c.b16 %v1876, %v1874
    %v1909 = vpack.c.b16 %v1877, %v1875
    %1942 = vmatprep.subr.bf16.mxu0 %v1879
    %1943 = vmatpush1.bf16.msra.mxu0 %v1878
    %1944 = vmatprep.subr.bf16.mxu0 %v1881
    %1945 = vmatpush1.bf16.msra.mxu0 %v1880
    %1946 = vmatprep.subr.bf16.mxu0 %v1883
    %1947 = vmatpush1.bf16.msra.mxu0 %v1882
    %1948 = vmatprep.subr.bf16.mxu0 %v1885
    %1949 = vmatpush1.bf16.msra.mxu0 %v1884
    %1950 = vmatprep.subr.bf16.mxu0 %v1887
    %1951 = vmatpush1.bf16.msra.mxu0 %v1886
    %1952 = vmatprep.subr.bf16.mxu0 %v1889
    %1953 = vmatpush1.bf16.msra.mxu0 %v1888
    %1954 = vmatprep.subr.bf16.mxu0 %v1891
    %1955 = vmatpush1.bf16.msra.mxu0 %v1890
    %1956 = vmatprep.subr.bf16.mxu0 %v1893
    %1957 = vmatpush1.bf16.msra.mxu0 %v1892
    %1958 = vmatprep.subr.bf16.mxu0 %v1895
    %1959 = vmatpush1.bf16.msra.mxu0 %v1894
    %1960 = vmatprep.subr.bf16.mxu0 %v1897
    %1961 = vmatpush1.bf16.msra.mxu0 %v1896
    %1962 = vmatprep.subr.bf16.mxu0 %v1899
    %1963 = vmatpush1.bf16.msra.mxu0 %v1898
    %1964 = vmatprep.subr.bf16.mxu0 %v1901
    %1965 = vmatpush1.bf16.msra.mxu0 %v1900
    %1966 = vmatprep.subr.bf16.mxu0 %v1903
    %1967 = vmatpush1.bf16.msra.mxu0 %v1902
    %1968 = vmatprep.subr.bf16.mxu0 %v1905
    %1969 = vmatpush1.bf16.msra.mxu0 %v1904
    %1970 = vmatprep.subr.bf16.mxu0 %v1907
    %1971 = vmatpush1.bf16.msra.mxu0 %v1906
    %1972 = vmatprep.subr.bf16.mxu0 %v1909
    %1973 = vmatpush1.bf16.msra.mxu0 %v1908
    %1974 = vmatprep.mubr.bf16.mxu0 %v1735
    %1975 = vmatmul.mubr.bf16.gmra.mrb[0].mxu0 %v1734
    %v1976 = vpop.f32.mrb[0].mxu0
    %v1977 = vadd.f32 %v1775, %v1976
    %v1978 = vpop.f32.mrb[0].mxu0
    %v1979 = vadd.f32 %v1779, %v1978
    %v1980 = vpop.f32.mrb[0].mxu0
    %v1981 = vpop.f32.mrb[0].mxu0
    %1982 = vdwg.mxu0
    %v1983 = vpack.c.bf16 %v1977, %v1977
    %v1984 = vpack.c.bf16 %v1979, %v1979
    %v1985 = vtanh.bf16.pop %v1983
    %v1986 = vtanh.bf16.pop %v1984
    %s1987 = scalar_lea.vmem [#allocation7], 1792
    %v1988 = vld [vmem:[%s1987] sm:$0xff]
    %v1989 = vld [vmem:[%s1987 + $0x8] sm:$0xff]
    %v1990 = vld [vmem:[%s1987 + $0x10] sm:$0xff]
    %v1991 = vld [vmem:[%s1987 + $0x18] sm:$0xff]
    %v1992 = vld [vmem:[%s1987 + $0x20] sm:$0xff]
    %v1993 = vld [vmem:[%s1987 + $0x28] sm:$0xff]
    %v1994 = vld [vmem:[%s1987 + $0x30] sm:$0xff]
    %v1995 = vld [vmem:[%s1987 + $0x38] sm:$0xff]
    %v1996 = vld [vmem:[%s1987 + $0x40] sm:$0xff]
    %v1997 = vld [vmem:[%s1987 + $0x48] sm:$0xff]
    %v1998 = vld [vmem:[%s1987 + $0x50] sm:$0xff]
    %v1999 = vld [vmem:[%s1987 + $0x58] sm:$0xff]
    %v2000 = vld [vmem:[%s1987 + $0x60] sm:$0xff]
    %v2001 = vld [vmem:[%s1987 + $0x68] sm:$0xff]
    %v2002 = vld [vmem:[%s1987 + $0x70] sm:$0xff]
    %v2003 = vld [vmem:[%s1987 + $0x78] sm:$0xff]
    %v2004 = vld [vmem:[%s1987 + $0x80] sm:$0xff]
    %v2005 = vld [vmem:[%s1987 + $0x88] sm:$0xff]
    %v2006 = vld [vmem:[%s1987 + $0x90] sm:$0xff]
    %v2007 = vld [vmem:[%s1987 + $0x98] sm:$0xff]
    %v2008 = vld [vmem:[%s1987 + $0xa0] sm:$0xff]
    %v2009 = vld [vmem:[%s1987 + $0xa8] sm:$0xff]
    %v2010 = vld [vmem:[%s1987 + $0xb0] sm:$0xff]
    %v2011 = vld [vmem:[%s1987 + $0xb8] sm:$0xff]
    %v2012 = vld [vmem:[%s1987 + $0xc0] sm:$0xff]
    %v2013 = vld [vmem:[%s1987 + $0xc8] sm:$0xff]
    %v2014 = vld [vmem:[%s1987 + $0xd0] sm:$0xff]
    %v2015 = vld [vmem:[%s1987 + $0xd8] sm:$0xff]
    %v2016 = vld [vmem:[%s1987 + $0xe0] sm:$0xff]
    %v2017 = vld [vmem:[%s1987 + $0xe8] sm:$0xff]
    %v2018 = vld [vmem:[%s1987 + $0xf0] sm:$0xff]
    %v2019 = vld [vmem:[%s1987 + $0xf8] sm:$0xff]
    %s2020 = scalar_lea.vmem [#allocation10], 16
    %v2021 = vld [vmem:[%s2020] sm:$0x3]
    %v2023 = vlaneseq
    %v2024 = vshrl.u32 %v2023, 7
    %v2025 = vsub.s32 0, %v2024
    %v2026 = vrot.slane %v2021, %v2025
    %v2027 = vlaneseq
    %v2028 = vshrl.u32 %v2027, 7
    %v2029 = vsub.s32 1, %v2028
    %v2030 = vrot.slane %v2021, %v2029
    %v2065 = vunpack.c.l.b16 %v1988
    %v2066 = vunpack.c.h.b16 %v1988
    %v2067 = vunpack.c.l.b16 %v1989
    %v2068 = vunpack.c.h.b16 %v1989
    %v2069 = vunpack.c.l.b16 %v1990
    %v2070 = vunpack.c.h.b16 %v1990
    %v2071 = vunpack.c.l.b16 %v1991
    %v2072 = vunpack.c.h.b16 %v1991
    %v2073 = vunpack.c.l.b16 %v1992
    %v2074 = vunpack.c.h.b16 %v1992
    %v2075 = vunpack.c.l.b16 %v1993
    %v2076 = vunpack.c.h.b16 %v1993
    %v2077 = vunpack.c.l.b16 %v1994
    %v2078 = vunpack.c.h.b16 %v1994
    %v2079 = vunpack.c.l.b16 %v1995
    %v2080 = vunpack.c.h.b16 %v1995
    %v2081 = vunpack.c.l.b16 %v1996
    %v2082 = vunpack.c.h.b16 %v1996
    %v2083 = vunpack.c.l.b16 %v1997
    %v2084 = vunpack.c.h.b16 %v1997
    %v2085 = vunpack.c.l.b16 %v1998
    %v2086 = vunpack.c.h.b16 %v1998
    %v2087 = vunpack.c.l.b16 %v1999
    %v2088 = vunpack.c.h.b16 %v1999
    %v2089 = vunpack.c.l.b16 %v2000
    %v2090 = vunpack.c.h.b16 %v2000
    %v2091 = vunpack.c.l.b16 %v2001
    %v2092 = vunpack.c.h.b16 %v2001
    %v2093 = vunpack.c.l.b16 %v2002
    %v2094 = vunpack.c.h.b16 %v2002
    %v2095 = vunpack.c.l.b16 %v2003
    %v2096 = vunpack.c.h.b16 %v2003
    %v2097 = vunpack.c.l.b16 %v2004
    %v2098 = vunpack.c.h.b16 %v2004
    %v2099 = vunpack.c.l.b16 %v2005
    %v2100 = vunpack.c.h.b16 %v2005
    %v2101 = vunpack.c.l.b16 %v2006
    %v2102 = vunpack.c.h.b16 %v2006
    %v2103 = vunpack.c.l.b16 %v2007
    %v2104 = vunpack.c.h.b16 %v2007
    %v2105 = vunpack.c.l.b16 %v2008
    %v2106 = vunpack.c.h.b16 %v2008
    %v2107 = vunpack.c.l.b16 %v2009
    %v2108 = vunpack.c.h.b16 %v2009
    %v2109 = vunpack.c.l.b16 %v2010
    %v2110 = vunpack.c.h.b16 %v2010
    %v2111 = vunpack.c.l.b16 %v2011
    %v2112 = vunpack.c.h.b16 %v2011
    %v2113 = vunpack.c.l.b16 %v2012
    %v2114 = vunpack.c.h.b16 %v2012
    %v2115 = vunpack.c.l.b16 %v2013
    %v2116 = vunpack.c.h.b16 %v2013
    %v2117 = vunpack.c.l.b16 %v2014
    %v2118 = vunpack.c.h.b16 %v2014
    %v2119 = vunpack.c.l.b16 %v2015
    %v2120 = vunpack.c.h.b16 %v2015
    %v2121 = vunpack.c.l.b16 %v2016
    %v2122 = vunpack.c.h.b16 %v2016
    %v2123 = vunpack.c.l.b16 %v2017
    %v2124 = vunpack.c.h.b16 %v2017
    %v2125 = vunpack.c.l.b16 %v2018
    %v2126 = vunpack.c.h.b16 %v2018
    %v2127 = vunpack.c.l.b16 %v2019
    %v2128 = vunpack.c.h.b16 %v2019
    %v2129 = vpack.c.b16 %v2067, %v2065
    %v2130 = vpack.c.b16 %v2068, %v2066
    %v2131 = vpack.c.b16 %v2071, %v2069
    %v2132 = vpack.c.b16 %v2072, %v2070
    %v2133 = vpack.c.b16 %v2075, %v2073
    %v2134 = vpack.c.b16 %v2076, %v2074
    %v2135 = vpack.c.b16 %v2079, %v2077
    %v2136 = vpack.c.b16 %v2080, %v2078
    %v2137 = vpack.c.b16 %v2083, %v2081
    %v2138 = vpack.c.b16 %v2084, %v2082
    %v2139 = vpack.c.b16 %v2087, %v2085
    %v2140 = vpack.c.b16 %v2088, %v2086
    %v2141 = vpack.c.b16 %v2091, %v2089
    %v2142 = vpack.c.b16 %v2092, %v2090
    %v2143 = vpack.c.b16 %v2095, %v2093
    %v2144 = vpack.c.b16 %v2096, %v2094
    %v2145 = vpack.c.b16 %v2099, %v2097
    %v2146 = vpack.c.b16 %v2100, %v2098
    %v2147 = vpack.c.b16 %v2103, %v2101
    %v2148 = vpack.c.b16 %v2104, %v2102
    %v2149 = vpack.c.b16 %v2107, %v2105
    %v2150 = vpack.c.b16 %v2108, %v2106
    %v2151 = vpack.c.b16 %v2111, %v2109
    %v2152 = vpack.c.b16 %v2112, %v2110
    %v2153 = vpack.c.b16 %v2115, %v2113
    %v2154 = vpack.c.b16 %v2116, %v2114
    %v2155 = vpack.c.b16 %v2119, %v2117
    %v2156 = vpack.c.b16 %v2120, %v2118
    %v2157 = vpack.c.b16 %v2123, %v2121
    %v2158 = vpack.c.b16 %v2124, %v2122
    %v2159 = vpack.c.b16 %v2127, %v2125
    %v2160 = vpack.c.b16 %v2128, %v2126
    %2193 = vmatprep.subr.bf16.mxu0 %v2130
    %2194 = vmatpush1.bf16.msra.mxu0 %v2129
    %2195 = vmatprep.subr.bf16.mxu0 %v2132
    %2196 = vmatpush1.bf16.msra.mxu0 %v2131
    %2197 = vmatprep.subr.bf16.mxu0 %v2134
    %2198 = vmatpush1.bf16.msra.mxu0 %v2133
    %2199 = vmatprep.subr.bf16.mxu0 %v2136
    %2200 = vmatpush1.bf16.msra.mxu0 %v2135
    %2201 = vmatprep.subr.bf16.mxu0 %v2138
    %2202 = vmatpush1.bf16.msra.mxu0 %v2137
    %2203 = vmatprep.subr.bf16.mxu0 %v2140
    %2204 = vmatpush1.bf16.msra.mxu0 %v2139
    %2205 = vmatprep.subr.bf16.mxu0 %v2142
    %2206 = vmatpush1.bf16.msra.mxu0 %v2141
    %2207 = vmatprep.subr.bf16.mxu0 %v2144
    %2208 = vmatpush1.bf16.msra.mxu0 %v2143
    %2209 = vmatprep.subr.bf16.mxu0 %v2146
    %2210 = vmatpush1.bf16.msra.mxu0 %v2145
    %2211 = vmatprep.subr.bf16.mxu0 %v2148
    %2212 = vmatpush1.bf16.msra.mxu0 %v2147
    %2213 = vmatprep.subr.bf16.mxu0 %v2150
    %2214 = vmatpush1.bf16.msra.mxu0 %v2149
    %2215 = vmatprep.subr.bf16.mxu0 %v2152
    %2216 = vmatpush1.bf16.msra.mxu0 %v2151
    %2217 = vmatprep.subr.bf16.mxu0 %v2154
    %2218 = vmatpush1.bf16.msra.mxu0 %v2153
    %2219 = vmatprep.subr.bf16.mxu0 %v2156
    %2220 = vmatpush1.bf16.msra.mxu0 %v2155
    %2221 = vmatprep.subr.bf16.mxu0 %v2158
    %2222 = vmatpush1.bf16.msra.mxu0 %v2157
    %2223 = vmatprep.subr.bf16.mxu0 %v2160
    %2224 = vmatpush1.bf16.msra.mxu0 %v2159
    %2225 = vmatprep.mubr.bf16.mxu0 %v1986
    %2226 = vmatmul.mubr.bf16.gmra.mrb[0].mxu0 %v1985
    %v2227 = vpop.f32.mrb[0].mxu0
    %v2228 = vadd.f32 %v2026, %v2227
    %v2229 = vpop.f32.mrb[0].mxu0
    %v2230 = vadd.f32 %v2030, %v2229
    %v2231 = vpop.f32.mrb[0].mxu0
    %v2232 = vpop.f32.mrb[0].mxu0
    %2233 = vdwg.mxu0
    %v2234 = vpack.c.bf16 %v2228, %v2228
    %v2235 = vpack.c.bf16 %v2230, %v2230
    %v2236 = vmax.bf16 %v2234, 0
    %v2237 = vmax.bf16 %v2235, 0
    %s2238 = scalar_lea.vmem [#allocation7], 2048
    %v2239 = vld [vmem:[%s2238] sm:$0xff]
    %v2240 = vld [vmem:[%s2238 + $0x8] sm:$0xff]
    %v2241 = vld [vmem:[%s2238 + $0x10] sm:$0xff]
    %v2242 = vld [vmem:[%s2238 + $0x18] sm:$0xff]
    %v2243 = vld [vmem:[%s2238 + $0x20] sm:$0xff]
    %v2244 = vld [vmem:[%s2238 + $0x28] sm:$0xff]
    %v2245 = vld [vmem:[%s2238 + $0x30] sm:$0xff]
    %v2246 = vld [vmem:[%s2238 + $0x38] sm:$0xff]
    %v2247 = vld [vmem:[%s2238 + $0x40] sm:$0xff]
    %v2248 = vld [vmem:[%s2238 + $0x48] sm:$0xff]
    %v2249 = vld [vmem:[%s2238 + $0x50] sm:$0xff]
    %v2250 = vld [vmem:[%s2238 + $0x58] sm:$0xff]
    %v2251 = vld [vmem:[%s2238 + $0x60] sm:$0xff]
    %v2252 = vld [vmem:[%s2238 + $0x68] sm:$0xff]
    %v2253 = vld [vmem:[%s2238 + $0x70] sm:$0xff]
    %v2254 = vld [vmem:[%s2238 + $0x78] sm:$0xff]
    %v2255 = vld [vmem:[%s2238 + $0x80] sm:$0xff]
    %v2256 = vld [vmem:[%s2238 + $0x88] sm:$0xff]
    %v2257 = vld [vmem:[%s2238 + $0x90] sm:$0xff]
    %v2258 = vld [vmem:[%s2238 + $0x98] sm:$0xff]
    %v2259 = vld [vmem:[%s2238 + $0xa0] sm:$0xff]
    %v2260 = vld [vmem:[%s2238 + $0xa8] sm:$0xff]
    %v2261 = vld [vmem:[%s2238 + $0xb0] sm:$0xff]
    %v2262 = vld [vmem:[%s2238 + $0xb8] sm:$0xff]
    %v2263 = vld [vmem:[%s2238 + $0xc0] sm:$0xff]
    %v2264 = vld [vmem:[%s2238 + $0xc8] sm:$0xff]
    %v2265 = vld [vmem:[%s2238 + $0xd0] sm:$0xff]
    %v2266 = vld [vmem:[%s2238 + $0xd8] sm:$0xff]
    %v2267 = vld [vmem:[%s2238 + $0xe0] sm:$0xff]
    %v2268 = vld [vmem:[%s2238 + $0xe8] sm:$0xff]
    %v2269 = vld [vmem:[%s2238 + $0xf0] sm:$0xff]
    %v2270 = vld [vmem:[%s2238 + $0xf8] sm:$0xff]
    %s2271 = scalar_lea.vmem [#allocation10], 18
    %v2272 = vld [vmem:[%s2271] sm:$0x3]
    %v2274 = vlaneseq
    %v2275 = vshrl.u32 %v2274, 7
    %v2276 = vsub.s32 0, %v2275
    %v2277 = vrot.slane %v2272, %v2276
    %v2278 = vlaneseq
    %v2279 = vshrl.u32 %v2278, 7
    %v2280 = vsub.s32 1, %v2279
    %v2281 = vrot.slane %v2272, %v2280
    %v2316 = vunpack.c.l.b16 %v2239
    %v2317 = vunpack.c.h.b16 %v2239
    %v2318 = vunpack.c.l.b16 %v2240
    %v2319 = vunpack.c.h.b16 %v2240
    %v2320 = vunpack.c.l.b16 %v2241
    %v2321 = vunpack.c.h.b16 %v2241
    %v2322 = vunpack.c.l.b16 %v2242
    %v2323 = vunpack.c.h.b16 %v2242
    %v2324 = vunpack.c.l.b16 %v2243
    %v2325 = vunpack.c.h.b16 %v2243
    %v2326 = vunpack.c.l.b16 %v2244
    %v2327 = vunpack.c.h.b16 %v2244
    %v2328 = vunpack.c.l.b16 %v2245
    %v2329 = vunpack.c.h.b16 %v2245
    %v2330 = vunpack.c.l.b16 %v2246
    %v2331 = vunpack.c.h.b16 %v2246
    %v2332 = vunpack.c.l.b16 %v2247
    %v2333 = vunpack.c.h.b16 %v2247
    %v2334 = vunpack.c.l.b16 %v2248
    %v2335 = vunpack.c.h.b16 %v2248
    %v2336 = vunpack.c.l.b16 %v2249
    %v2337 = vunpack.c.h.b16 %v2249
    %v2338 = vunpack.c.l.b16 %v2250
    %v2339 = vunpack.c.h.b16 %v2250
    %v2340 = vunpack.c.l.b16 %v2251
    %v2341 = vunpack.c.h.b16 %v2251
    %v2342 = vunpack.c.l.b16 %v2252
    %v2343 = vunpack.c.h.b16 %v2252
    %v2344 = vunpack.c.l.b16 %v2253
    %v2345 = vunpack.c.h.b16 %v2253
    %v2346 = vunpack.c.l.b16 %v2254
    %v2347 = vunpack.c.h.b16 %v2254
    %v2348 = vunpack.c.l.b16 %v2255
    %v2349 = vunpack.c.h.b16 %v2255
    %v2350 = vunpack.c.l.b16 %v2256
    %v2351 = vunpack.c.h.b16 %v2256
    %v2352 = vunpack.c.l.b16 %v2257
    %v2353 = vunpack.c.h.b16 %v2257
    %v2354 = vunpack.c.l.b16 %v2258
    %v2355 = vunpack.c.h.b16 %v2258
    %v2356 = vunpack.c.l.b16 %v2259
    %v2357 = vunpack.c.h.b16 %v2259
    %v2358 = vunpack.c.l.b16 %v2260
    %v2359 = vunpack.c.h.b16 %v2260
    %v2360 = vunpack.c.l.b16 %v2261
    %v2361 = vunpack.c.h.b16 %v2261
    %v2362 = vunpack.c.l.b16 %v2262
    %v2363 = vunpack.c.h.b16 %v2262
    %v2364 = vunpack.c.l.b16 %v2263
    %v2365 = vunpack.c.h.b16 %v2263
    %v2366 = vunpack.c.l.b16 %v2264
    %v2367 = vunpack.c.h.b16 %v2264
    %v2368 = vunpack.c.l.b16 %v2265
    %v2369 = vunpack.c.h.b16 %v2265
    %v2370 = vunpack.c.l.b16 %v2266
    %v2371 = vunpack.c.h.b16 %v2266
    %v2372 = vunpack.c.l.b16 %v2267
    %v2373 = vunpack.c.h.b16 %v2267
    %v2374 = vunpack.c.l.b16 %v2268
    %v2375 = vunpack.c.h.b16 %v2268
    %v2376 = vunpack.c.l.b16 %v2269
    %v2377 = vunpack.c.h.b16 %v2269
    %v2378 = vunpack.c.l.b16 %v2270
    %v2379 = vunpack.c.h.b16 %v2270
    %v2380 = vpack.c.b16 %v2318, %v2316
    %v2381 = vpack.c.b16 %v2319, %v2317
    %v2382 = vpack.c.b16 %v2322, %v2320
    %v2383 = vpack.c.b16 %v2323, %v2321
    %v2384 = vpack.c.b16 %v2326, %v2324
    %v2385 = vpack.c.b16 %v2327, %v2325
    %v2386 = vpack.c.b16 %v2330, %v2328
    %v2387 = vpack.c.b16 %v2331, %v2329
    %v2388 = vpack.c.b16 %v2334, %v2332
    %v2389 = vpack.c.b16 %v2335, %v2333
    %v2390 = vpack.c.b16 %v2338, %v2336
    %v2391 = vpack.c.b16 %v2339, %v2337
    %v2392 = vpack.c.b16 %v2342, %v2340
    %v2393 = vpack.c.b16 %v2343, %v2341
    %v2394 = vpack.c.b16 %v2346, %v2344
    %v2395 = vpack.c.b16 %v2347, %v2345
    %v2396 = vpack.c.b16 %v2350, %v2348
    %v2397 = vpack.c.b16 %v2351, %v2349
    %v2398 = vpack.c.b16 %v2354, %v2352
    %v2399 = vpack.c.b16 %v2355, %v2353
    %v2400 = vpack.c.b16 %v2358, %v2356
    %v2401 = vpack.c.b16 %v2359, %v2357
    %v2402 = vpack.c.b16 %v2362, %v2360
    %v2403 = vpack.c.b16 %v2363, %v2361
    %v2404 = vpack.c.b16 %v2366, %v2364
    %v2405 = vpack.c.b16 %v2367, %v2365
    %v2406 = vpack.c.b16 %v2370, %v2368
    %v2407 = vpack.c.b16 %v2371, %v2369
    %v2408 = vpack.c.b16 %v2374, %v2372
    %v2409 = vpack.c.b16 %v2375, %v2373
    %v2410 = vpack.c.b16 %v2378, %v2376
    %v2411 = vpack.c.b16 %v2379, %v2377
    %2444 = vmatprep.subr.bf16.mxu0 %v2381
    %2445 = vmatpush1.bf16.msra.mxu0 %v2380
    %2446 = vmatprep.subr.bf16.mxu0 %v2383
    %2447 = vmatpush1.bf16.msra.mxu0 %v2382
    %2448 = vmatprep.subr.bf16.mxu0 %v2385
    %2449 = vmatpush1.bf16.msra.mxu0 %v2384
    %2450 = vmatprep.subr.bf16.mxu0 %v2387
    %2451 = vmatpush1.bf16.msra.mxu0 %v2386
    %2452 = vmatprep.subr.bf16.mxu0 %v2389
    %2453 = vmatpush1.bf16.msra.mxu0 %v2388
    %2454 = vmatprep.subr.bf16.mxu0 %v2391
    %2455 = vmatpush1.bf16.msra.mxu0 %v2390
    %2456 = vmatprep.subr.bf16.mxu0 %v2393
    %2457 = vmatpush1.bf16.msra.mxu0 %v2392
    %2458 = vmatprep.subr.bf16.mxu0 %v2395
    %2459 = vmatpush1.bf16.msra.mxu0 %v2394
    %2460 = vmatprep.subr.bf16.mxu0 %v2397
    %2461 = vmatpush1.bf16.msra.mxu0 %v2396
    %2462 = vmatprep.subr.bf16.mxu0 %v2399
    %2463 = vmatpush1.bf16.msra.mxu0 %v2398
    %2464 = vmatprep.subr.bf16.mxu0 %v2401
    %2465 = vmatpush1.bf16.msra.mxu0 %v2400
    %2466 = vmatprep.subr.bf16.mxu0 %v2403
    %2467 = vmatpush1.bf16.msra.mxu0 %v2402
    %2468 = vmatprep.subr.bf16.mxu0 %v2405
    %2469 = vmatpush1.bf16.msra.mxu0 %v2404
    %2470 = vmatprep.subr.bf16.mxu0 %v2407
    %2471 = vmatpush1.bf16.msra.mxu0 %v2406
    %2472 = vmatprep.subr.bf16.mxu0 %v2409
    %2473 = vmatpush1.bf16.msra.mxu0 %v2408
    %2474 = vmatprep.subr.bf16.mxu0 %v2411
    %2475 = vmatpush1.bf16.msra.mxu0 %v2410
    %2476 = vmatprep.mubr.bf16.mxu0 %v2237
    %2477 = vmatmul.mubr.bf16.gmra.mrb[0].mxu0 %v2236
    %v2478 = vpop.f32.mrb[0].mxu0
    %v2479 = vadd.f32 %v2277, %v2478
    %v2480 = vpop.f32.mrb[0].mxu0
    %v2481 = vadd.f32 %v2281, %v2480
    %v2482 = vpop.f32.mrb[0].mxu0
    %v2483 = vpop.f32.mrb[0].mxu0
    %2484 = vdwg.mxu0
    %v2485 = vpack.c.bf16 %v2479, %v2479
    %v2486 = vpack.c.bf16 %v2481, %v2481
    %v2487 = vtanh.bf16.pop %v2485
    %v2488 = vtanh.bf16.pop %v2486
    %v2489 = vld [vmem:[#allocation8] sm:$0xf]
    %v2490 = vld [vmem:[#allocation8 + $0x4] sm:$0xf]
    %v2491 = vld [vmem:[#allocation8 + $0x8] sm:$0xf]
    %v2492 = vld [vmem:[#allocation8 + $0xc] sm:$0xf]
    %v2493 = vld [vmem:[#allocation8 + $0x10] sm:$0xf]
    %v2494 = vld [vmem:[#allocation8 + $0x14] sm:$0xf]
    %v2495 = vld [vmem:[#allocation8 + $0x18] sm:$0xf]
    %v2496 = vld [vmem:[#allocation8 + $0x1c] sm:$0xf]
    %v2497 = vld [vmem:[#allocation8 + $0x20] sm:$0xf]
    %v2498 = vld [vmem:[#allocation8 + $0x24] sm:$0xf]
    %v2499 = vld [vmem:[#allocation8 + $0x28] sm:$0xf]
    %v2500 = vld [vmem:[#allocation8 + $0x2c] sm:$0xf]
    %v2501 = vld [vmem:[#allocation8 + $0x30] sm:$0xf]
    %v2502 = vld [vmem:[#allocation8 + $0x34] sm:$0xf]
    %v2503 = vld [vmem:[#allocation8 + $0x38] sm:$0xf]
    %v2504 = vld [vmem:[#allocation8 + $0x3c] sm:$0xf]
    %v2505 = vld [vmem:[#allocation8 + $0x40] sm:$0xf]
    %v2506 = vld [vmem:[#allocation8 + $0x44] sm:$0xf]
    %v2507 = vld [vmem:[#allocation8 + $0x48] sm:$0xf]
    %v2508 = vld [vmem:[#allocation8 + $0x4c] sm:$0xf]
    %v2509 = vld [vmem:[#allocation8 + $0x50] sm:$0xf]
    %v2510 = vld [vmem:[#allocation8 + $0x54] sm:$0xf]
    %v2511 = vld [vmem:[#allocation8 + $0x58] sm:$0xf]
    %v2512 = vld [vmem:[#allocation8 + $0x5c] sm:$0xf]
    %v2513 = vld [vmem:[#allocation8 + $0x60] sm:$0xf]
    %v2514 = vld [vmem:[#allocation8 + $0x64] sm:$0xf]
    %v2515 = vld [vmem:[#allocation8 + $0x68] sm:$0xf]
    %v2516 = vld [vmem:[#allocation8 + $0x6c] sm:$0xf]
    %v2517 = vld [vmem:[#allocation8 + $0x70] sm:$0xf]
    %v2518 = vld [vmem:[#allocation8 + $0x74] sm:$0xf]
    %v2519 = vld [vmem:[#allocation8 + $0x78] sm:$0xf]
    %v2520 = vld [vmem:[#allocation8 + $0x7c] sm:$0xf]
    %v2521 = vld [vmem:[#allocation11] sm:$0x1]
    %v2523 = vlaneseq
    %v2524 = vshrl.u32 %v2523, 7
    %v2525 = vsub.s32 0, %v2524
    %v2526 = vrot.slane %v2521, %v2525
    %v2560 = vunpack.c.l.b16 %v2489
    %v2561 = vunpack.c.l.b16 %v2490
    %v2562 = vunpack.c.l.b16 %v2491
    %v2563 = vunpack.c.l.b16 %v2492
    %v2564 = vunpack.c.l.b16 %v2493
    %v2565 = vunpack.c.l.b16 %v2494
    %v2566 = vunpack.c.l.b16 %v2495
    %v2567 = vunpack.c.l.b16 %v2496
    %v2568 = vunpack.c.l.b16 %v2497
    %v2569 = vunpack.c.l.b16 %v2498
    %v2570 = vunpack.c.l.b16 %v2499
    %v2571 = vunpack.c.l.b16 %v2500
    %v2572 = vunpack.c.l.b16 %v2501
    %v2573 = vunpack.c.l.b16 %v2502
    %v2574 = vunpack.c.l.b16 %v2503
    %v2575 = vunpack.c.l.b16 %v2504
    %v2576 = vunpack.c.l.b16 %v2505
    %v2577 = vunpack.c.l.b16 %v2506
    %v2578 = vunpack.c.l.b16 %v2507
    %v2579 = vunpack.c.l.b16 %v2508
    %v2580 = vunpack.c.l.b16 %v2509
    %v2581 = vunpack.c.l.b16 %v2510
    %v2582 = vunpack.c.l.b16 %v2511
    %v2583 = vunpack.c.l.b16 %v2512
    %v2584 = vunpack.c.l.b16 %v2513
    %v2585 = vunpack.c.l.b16 %v2514
    %v2586 = vunpack.c.l.b16 %v2515
    %v2587 = vunpack.c.l.b16 %v2516
    %v2588 = vunpack.c.l.b16 %v2517
    %v2589 = vunpack.c.l.b16 %v2518
    %v2590 = vunpack.c.l.b16 %v2519
    %v2591 = vunpack.c.l.b16 %v2520
    %v2592 = vpack.c.b16 %v2561, %v2560
    %v2593 = vpack.c.b16 %v2563, %v2562
    %v2594 = vpack.c.b16 %v2565, %v2564
    %v2595 = vpack.c.b16 %v2567, %v2566
    %v2596 = vpack.c.b16 %v2569, %v2568
    %v2597 = vpack.c.b16 %v2571, %v2570
    %v2598 = vpack.c.b16 %v2573, %v2572
    %v2599 = vpack.c.b16 %v2575, %v2574
    %v2600 = vpack.c.b16 %v2577, %v2576
    %v2601 = vpack.c.b16 %v2579, %v2578
    %v2602 = vpack.c.b16 %v2581, %v2580
    %v2603 = vpack.c.b16 %v2583, %v2582
    %v2604 = vpack.c.b16 %v2585, %v2584
    %v2605 = vpack.c.b16 %v2587, %v2586
    %v2606 = vpack.c.b16 %v2589, %v2588
    %v2607 = vpack.c.b16 %v2591, %v2590
    %2624 = vmatprep.subr.bf16.mxu0 0
    %2625 = vmatpush1.bf16.msra.mxu0 %v2592
    %2626 = vmatprep.subr.bf16.mxu0 0
    %2627 = vmatpush1.bf16.msra.mxu0 %v2593
    %2628 = vmatprep.subr.bf16.mxu0 0
    %2629 = vmatpush1.bf16.msra.mxu0 %v2594
    %2630 = vmatprep.subr.bf16.mxu0 0
    %2631 = vmatpush1.bf16.msra.mxu0 %v2595
    %2632 = vmatprep.subr.bf16.mxu0 0
    %2633 = vmatpush1.bf16.msra.mxu0 %v2596
    %2634 = vmatprep.subr.bf16.mxu0 0
    %2635 = vmatpush1.bf16.msra.mxu0 %v2597
    %2636 = vmatprep.subr.bf16.mxu0 0
    %2637 = vmatpush1.bf16.msra.mxu0 %v2598
    %2638 = vmatprep.subr.bf16.mxu0 0
    %2639 = vmatpush1.bf16.msra.mxu0 %v2599
    %2640 = vmatprep.subr.bf16.mxu0 0
    %2641 = vmatpush1.bf16.msra.mxu0 %v2600
    %2642 = vmatprep.subr.bf16.mxu0 0
    %2643 = vmatpush1.bf16.msra.mxu0 %v2601
    %2644 = vmatprep.subr.bf16.mxu0 0
    %2645 = vmatpush1.bf16.msra.mxu0 %v2602
    %2646 = vmatprep.subr.bf16.mxu0 0
    %2647 = vmatpush1.bf16.msra.mxu0 %v2603
    %2648 = vmatprep.subr.bf16.mxu0 0
    %2649 = vmatpush1.bf16.msra.mxu0 %v2604
    %2650 = vmatprep.subr.bf16.mxu0 0
    %2651 = vmatpush1.bf16.msra.mxu0 %v2605
    %2652 = vmatprep.subr.bf16.mxu0 0
    %2653 = vmatpush1.bf16.msra.mxu0 %v2606
    %2654 = vmatprep.subr.bf16.mxu0 0
    %2655 = vmatpush1.bf16.msra.mxu0 %v2607
    %2656 = vmatprep.mubr.bf16.mxu0 %v2488
    %2657 = vmatmul.mubr.bf16.gmra.mrb[0].mxu0 %v2487
    %v2658 = vpop.f32.mrb[0].mxu0
    %v2659 = vadd.f32 %v2526, %v2658
    %v2660 = vpop.f32.mrb[0].mxu0
    %v2661 = vpop.f32.mrb[0].mxu0
    %v2662 = vpop.f32.mrb[0].mxu0
    %2663 = vdwg.mxu0
    %2664 = vst [vmem:[#allocation13] sm:$0xff] %v2659
    // Predicated region
    $region50: #{tpu_custom_call.1} parent=1 // pred_check
      _
    $region51: #{tpu_custom_call.1} parent=1 // pred_check_branch
      %2666 = sbr.rel (0) target = $region53
    $region52: #{tpu_custom_call.1} parent=1 // pred_region
      %s2668 = ssub.s32 128, 128
      %2669 = vsyncadd [#allocation4], %s2668
      %s2671 = sshll.u32 [#allocation13], 4
      %s2672 = int_to_ptr.vmem [resolvable:$true] %s2671
      %2674 = dma.vmem_to_hbm [thread:$0]  %s2672, 128, %s6, [#allocation4]
    $region53: #{tpu_custom_call.1} parent=1 // pred_fallthru
      _
    // Predicated region
    $region54: #{tpu_custom_call.1} parent=1 // pred_check
      _
    $region55: #{tpu_custom_call.1} parent=1 // pred_check_branch
      %2676 = sbr.rel (0) target = $region57
    $region56: #{tpu_custom_call.1} parent=1 // pred_region
      %2677 = dma.done [#allocation4], 128
    $region57: #{tpu_custom_call.1} parent=1 // pred_fallthru
      _
    %2678 = vsyncpa [#allocation3], 1
    %2679 = vsyncpa [#allocation6], 1
    %2680 = vsyncpa [#allocation9], 1
    %2681 = vsyncpa [#allocation12], 1
    %2682 = vsyncpa [#allocation4], 1

</llo_original>
